<compile_context>
chip_gen: v6e
topology: v6e:2x2x1
jax: 0.10.0
libtpu: 0.0.40
codegen_flags: <defaults>
</compile_context>

<pallas_src>
import jax
import jax.numpy as jnp
from jax import lax
from jax.experimental import pallas as pl
from jax.experimental.pallas import tpu as pltpu

# ----------------------------- config -----------------------------
BATCH = 8
WINDOW = 8          # sequence length T
INPUT_SIZE = 6
HIDDEN = 32
NUM_CLASSES = 12
BN_EPS = 1e-5


# ----------------------------- fused kernel -----------------------------
def fused_kernel(x_ref, wbig_ref, btile_ref, whh_t_ref, h0_ref, c0_ref,
                 w1_ref, b1_ref, g1_ref, be1_ref,
                 w2_ref, b2_ref, g2_ref, be2_ref,
                 w3_ref, b3_ref, g3_ref, be3_ref,
                 out_ref):
    """LSTM (T steps) + Flatten + Linear/BN/ReLU + Linear/BN/Tanh + Linear/BN + Softmax."""
    H, T = HIDDEN, WINDOW
    G = 4 * H
    B = x_ref.shape[0]

    # ---- all-timestep input projection: one MXU pass, bias folded in once ----
    # x_flat (B, T*I) @ block-diag(W_ih^T) (T*I, T*4H)  ->  (B, T*4H)
    gates_x = jnp.dot(x_ref[...], wbig_ref[...],
                      preferred_element_type=jnp.float32) + btile_ref[...]

    whh_t = whh_t_ref[...]                     # (H, 4H)
    h = h0_ref[...]                            # (B, H)
    c = c0_ref[...]                            # (B, H)
    # Flatten + Linear-1 fused: accumulate y = b1 + sum_t h_t @ W1^T_block_t
    y = jnp.broadcast_to(b1_ref[...], (B, H))

    # ---- fully-unrolled T=8 recurrence; h/c live in vregs ----
    for t in range(T):
        g = gates_x[:, t * G:(t + 1) * G] + jnp.dot(
            h, whh_t, preferred_element_type=jnp.float32)        # (B, 4H)
        i_g = jax.nn.sigmoid(g[:, 0 * H:1 * H])
        f_g = jax.nn.sigmoid(g[:, 1 * H:2 * H])
        g_g = jnp.tanh(g[:, 2 * H:3 * H])
        o_g = jax.nn.sigmoid(g[:, 3 * H:4 * H])
        c = f_g * c + i_g * g_g
        h = o_g * jnp.tanh(c)
        # Linear-1 contribution of the t-th flattened block (off critical path).
        y = y + jnp.dot(h, w1_ref[t * H:(t + 1) * H, :],
                        preferred_element_type=jnp.float32)

    # ---- head: BN(train-mode batch stats) in scale/shift form ----
    def bn(z, gamma, beta):
        mean = jnp.mean(z, axis=0, keepdims=True)
        var = jnp.mean((z - mean) ** 2, axis=0, keepdims=True)   # biased (training mode)
        scale = gamma * lax.rsqrt(var + BN_EPS)
        return z * scale + (beta - mean * scale)

    y = jnp.maximum(bn(y, g1_ref[...], be1_ref[...]), 0.0)                     # BN + ReLU
    y = jnp.dot(y, w2_ref[...], preferred_element_type=jnp.float32) + b2_ref[...]
    y = jnp.tanh(bn(y, g2_ref[...], be2_ref[...]))                             # BN + Tanh
    y = jnp.dot(y, w3_ref[...], preferred_element_type=jnp.float32) + b3_ref[...]
    y = bn(y, g3_ref[...], be3_ref[...])

    # Softmax(dim=1) with EUP reciprocal instead of divide.
    y = y - jnp.max(y, axis=1, keepdims=True)
    e = jnp.exp(y)
    out_ref[...] = e * pl.reciprocal(jnp.sum(e, axis=1, keepdims=True), approx=False)


def model_hapt_forward(x, kp):
    """x: (B, T, 6)  ->  (B, 12) softmax probabilities. Single kernel dispatch."""
    B = x.shape[0]
    # (B, T, I) -> (B, T*I): merges trailing dims (no transpose, layout-preserving).
    x_flat = x.reshape(B, WINDOW * INPUT_SIZE)
    vmem = pl.BlockSpec(memory_space=pltpu.MemorySpace.VMEM)
    args = (x_flat, kp['w_big'], kp['b_tile'], kp['whh_t'], kp['h0'], kp['c0'],
            kp['w1_t'], kp['b1'], kp['g1'], kp['be1'],
            kp['w2_t'], kp['b2'], kp['g2'], kp['be2'],
            kp['w3_t'], kp['b3'], kp['g3'], kp['be3'])
    return pl.pallas_call(
        fused_kernel,
        out_shape=jax.ShapeDtypeStruct((B, NUM_CLASSES), jnp.float32),
        in_specs=[vmem] * len(args),
        out_specs=vmem,
    )(*args)


# ----------------------------- parameters -----------------------------
def init_params(key):
    """Parameters in PyTorch layout (Linear: (out, in); LSTM: (4H, in))."""
    ks = jax.random.split(key, 12)
    H, I, T, C, B = HIDDEN, INPUT_SIZE, WINDOW, NUM_CLASSES, BATCH
    s = 0.1
    return {
        # LSTM, PyTorch gate order (i, f, g, o)
        'w_ih': jax.random.normal(ks[0], (4 * H, I), jnp.float32) * s,
        'w_hh': jax.random.normal(ks[1], (4 * H, H), jnp.float32) * s,
        'b_ih': jax.random.normal(ks[2], (4 * H,), jnp.float32) * s,
        'b_hh': jax.random.normal(ks[3], (4 * H,), jnp.float32) * s,
        # h0 / c0 ~ randn (module stores (num_layers, B, H); squeezed here)
        'h0': jax.random.normal(ks[4], (B, H), jnp.float32),
        'c0': jax.random.normal(ks[5], (B, H), jnp.float32),
        # Linear 1: T*H -> H
        'w1': jax.random.normal(ks[6], (H, T * H), jnp.float32) * s,
        'b1': jax.random.normal(ks[7], (H,), jnp.float32) * s,
        'g1': jnp.ones((H,), jnp.float32), 'be1': jnp.zeros((H,), jnp.float32),
        # Linear 2: H -> H
        'w2': jax.random.normal(ks[8], (H, H), jnp.float32) * s,
        'b2': jax.random.normal(ks[9], (H,), jnp.float32) * s,
        'g2': jnp.ones((H,), jnp.float32), 'be2': jnp.zeros((H,), jnp.float32),
        # Linear 3: H -> 12
        'w3': jax.random.normal(ks[10], (C, H), jnp.float32) * s,
        'b3': jax.random.normal(ks[11], (C,), jnp.float32) * s,
        'g3': jnp.ones((C,), jnp.float32), 'be3': jnp.zeros((C,), jnp.float32),
    }


def prepare_kernel_params(p):
    """One-time layout transform (done outside the jitted forward)."""
    T, H = WINDOW, HIDDEN
    wih_t = p['w_ih'].T                                            # (I, 4H)
    # Block-diagonal weight so ALL timesteps' input projections are one matmul:
    # (B, T*I) @ (T*I, T*4H) -> (B, T*4H), block t == x_t @ W_ih^T.
    w_big = jnp.kron(jnp.eye(T, dtype=jnp.float32), wih_t)         # (T*I, T*4H)
    b = p['b_ih'] + p['b_hh']                                      # (4H,)
    b_tile = jnp.tile(b, (T,)).reshape(1, T * 4 * H)               # (1, T*4H)
    r = lambda v: v.reshape(1, -1)
    return {
        'w_big': w_big, 'b_tile': b_tile, 'whh_t': p['w_hh'].T,
        'h0': p['h0'], 'c0': p['c0'],
        'w1_t': p['w1'].T, 'b1': r(p['b1']), 'g1': r(p['g1']), 'be1': r(p['be1']),
        'w2_t': p['w2'].T, 'b2': r(p['b2']), 'g2': r(p['g2']), 'be2': r(p['be2']),
        'w3_t': p['w3'].T, 'b3': r(p['b3']), 'g3': r(p['g3']), 'be3': r(p['be3']),
    }


# ----------------------------- pure-JAX reference -----------------------------
def reference_forward(x, p):
    """Straightforward JAX port of the PyTorch forward (for correctness check)."""
    H = HIDDEN
    hp = lax.Precision.HIGHEST
    b = p['b_ih'] + p['b_hh']
    h, c = p['h0'], p['c0']
    outs = []
    for t in range(WINDOW):
        gates = (jnp.dot(x[:, t, :], p['w_ih'].T, precision=hp)
                 + jnp.dot(h, p['w_hh'].T, precision=hp) + b)
        i_g = jax.nn.sigmoid(gates[:, 0 * H:1 * H])
        f_g = jax.nn.sigmoid(gates[:, 1 * H:2 * H])
        g_g = jnp.tanh(gates[:, 2 * H:3 * H])
        o_g = jax.nn.sigmoid(gates[:, 3 * H:4 * H])
        c = f_g * c + i_g * g_g
        h = o_g * jnp.tanh(c)
        outs.append(h)
    feat = jnp.concatenate(outs, axis=1)                           # (B, T*H)

    def bn(z, gamma, beta):
        mean = jnp.mean(z, axis=0, keepdims=True)
        var = jnp.mean((z - mean) ** 2, axis=0, keepdims=True)
        return (z - mean) / jnp.sqrt(var + BN_EPS) * gamma + beta

    y = jnp.dot(feat, p['w1'].T, precision=hp) + p['b1']
    y = jnp.maximum(bn(y, p['g1'], p['be1']), 0.0)
    y = jnp.dot(y, p['w2'].T, precision=hp) + p['b2']
    y = jnp.tanh(bn(y, p['g2'], p['be2']))
    y = jnp.dot(y, p['w3'].T, precision=hp) + p['b3']
    y = bn(y, p['g3'], p['be3'])
    return jax.nn.softmax(y, axis=1)


if __name__ == "__main__":
    key = jax.random.PRNGKey(0)
    pkey, xkey = jax.random.split(key)
    params = init_params(pkey)
    kparams = prepare_kernel_params(params)        # one-time, outside the hot path
    x = jax.random.normal(xkey, (BATCH, WINDOW, INPUT_SIZE), jnp.float32)

    fwd = jax.jit(model_hapt_forward)
    out = jax.block_until_ready(fwd(x, kparams))

    assert out.shape == (BATCH, NUM_CLASSES)
    assert bool(jnp.all(jnp.isfinite(out)))
    assert bool(jnp.allclose(jnp.sum(out, axis=1), 1.0, atol=1e-5))

    ref = reference_forward(x, params)
    assert bool(jnp.allclose(out, ref, rtol=5e-3, atol=5e-3))

    print("KERNEL_OK")
</pallas_src>

<mosaic_0001>
module attributes {stable_mosaic.version = 11 : i64} {
  func.func @fused_kernel(%arg0: memref<8x48xf32, #tpu.memory_space<vmem>>, %arg1: memref<48x1024xf32, #tpu.memory_space<vmem>>, %arg2: memref<1x1024xf32, #tpu.memory_space<vmem>>, %arg3: memref<32x128xf32, #tpu.memory_space<vmem>>, %arg4: memref<8x32xf32, #tpu.memory_space<vmem>>, %arg5: memref<8x32xf32, #tpu.memory_space<vmem>>, %arg6: memref<256x32xf32, #tpu.memory_space<vmem>>, %arg7: memref<1x32xf32, #tpu.memory_space<vmem>>, %arg8: memref<1x32xf32, #tpu.memory_space<vmem>>, %arg9: memref<1x32xf32, #tpu.memory_space<vmem>>, %arg10: memref<32x32xf32, #tpu.memory_space<vmem>>, %arg11: memref<1x32xf32, #tpu.memory_space<vmem>>, %arg12: memref<1x32xf32, #tpu.memory_space<vmem>>, %arg13: memref<1x32xf32, #tpu.memory_space<vmem>>, %arg14: memref<32x12xf32, #tpu.memory_space<vmem>>, %arg15: memref<1x12xf32, #tpu.memory_space<vmem>>, %arg16: memref<1x12xf32, #tpu.memory_space<vmem>>, %arg17: memref<1x12xf32, #tpu.memory_space<vmem>>, %arg18: memref<8x12xf32, #tpu.memory_space<vmem>>) attributes {dimension_semantics = [], scalar_prefetch = 0 : i64, scratch_operands = 0 : i64, tpu.core_type = #tpu.core_type<tc>} {
    %c0 = arith.constant 0 : index
    %c0_0 = arith.constant 0 : index
    %0 = vector.load %arg0[%c0, %c0_0] : memref<8x48xf32, #tpu.memory_space<vmem>>, vector<8x48xf32>
    %c0_1 = arith.constant 0 : index
    %c0_2 = arith.constant 0 : index
    %1 = vector.load %arg1[%c0_1, %c0_2] : memref<48x1024xf32, #tpu.memory_space<vmem>>, vector<48x1024xf32>
    %cst = arith.constant dense<0.000000e+00> : vector<8x1024xf32>
    %2 = tpu.matmul %0, %1, %cst {dimension_numbers = #tpu.dot_dimension_numbers<[1], [0], [0], [1], [0, 0, 1, 1], [], []>} : vector<8x48xf32>, vector<48x1024xf32>, vector<8x1024xf32> -> vector<8x1024xf32>
    %c0_3 = arith.constant 0 : index
    %c0_4 = arith.constant 0 : index
    %3 = vector.load %arg2[%c0_3, %c0_4] : memref<1x1024xf32, #tpu.memory_space<vmem>>, vector<1x1024xf32>
    %4 = vector.broadcast %3 : vector<1x1024xf32> to vector<8x1024xf32>
    %5 = arith.addf %2, %4 : vector<8x1024xf32>
    %c0_5 = arith.constant 0 : index
    %c0_6 = arith.constant 0 : index
    %6 = vector.load %arg3[%c0_5, %c0_6] : memref<32x128xf32, #tpu.memory_space<vmem>>, vector<32x128xf32>
    %c0_7 = arith.constant 0 : index
    %c0_8 = arith.constant 0 : index
    %7 = vector.load %arg4[%c0_7, %c0_8] : memref<8x32xf32, #tpu.memory_space<vmem>>, vector<8x32xf32>
    %c0_9 = arith.constant 0 : index
    %c0_10 = arith.constant 0 : index
    %8 = vector.load %arg5[%c0_9, %c0_10] : memref<8x32xf32, #tpu.memory_space<vmem>>, vector<8x32xf32>
    %c0_11 = arith.constant 0 : index
    %c0_12 = arith.constant 0 : index
    %9 = vector.load %arg7[%c0_11, %c0_12] : memref<1x32xf32, #tpu.memory_space<vmem>>, vector<1x32xf32>
    %10 = vector.shape_cast %9 : vector<1x32xf32> to vector<1x32xf32>
    %11 = vector.broadcast %10 : vector<1x32xf32> to vector<8x32xf32>
    %12 = vector.extract_strided_slice %5 {offsets = [0, 0], sizes = [8, 128], strides = [1, 1]} : vector<8x1024xf32> to vector<8x128xf32>
    %cst_13 = arith.constant dense<0.000000e+00> : vector<8x128xf32>
    %13 = tpu.matmul %7, %6, %cst_13 {dimension_numbers = #tpu.dot_dimension_numbers<[1], [0], [0], [1], [0, 0, 1, 1], [], []>} : vector<8x32xf32>, vector<32x128xf32>, vector<8x128xf32> -> vector<8x128xf32>
    %14 = arith.addf %12, %13 : vector<8x128xf32>
    %15 = vector.extract_strided_slice %14 {offsets = [0, 0], sizes = [8, 32], strides = [1, 1]} : vector<8x128xf32> to vector<8x32xf32>
    %16 = arith.negf %15 : vector<8x32xf32>
    %17 = math.exp %16 : vector<8x32xf32>
    %cst_14 = arith.constant 1.000000e+00 : f32
    %18 = vector.broadcast %cst_14 : f32 to vector<8x32xf32>
    %19 = arith.addf %18, %17 : vector<8x32xf32>
    %20 = arith.divf %18, %19 : vector<8x32xf32>
    %21 = vector.extract_strided_slice %14 {offsets = [0, 32], sizes = [8, 32], strides = [1, 1]} : vector<8x128xf32> to vector<8x32xf32>
    %22 = arith.negf %21 : vector<8x32xf32>
    %23 = math.exp %22 : vector<8x32xf32>
    %cst_15 = arith.constant 1.000000e+00 : f32
    %24 = vector.broadcast %cst_15 : f32 to vector<8x32xf32>
    %25 = arith.addf %24, %23 : vector<8x32xf32>
    %26 = arith.divf %24, %25 : vector<8x32xf32>
    %27 = vector.extract_strided_slice %14 {offsets = [0, 64], sizes = [8, 32], strides = [1, 1]} : vector<8x128xf32> to vector<8x32xf32>
    %28 = math.tanh %27 : vector<8x32xf32>
    %29 = vector.extract_strided_slice %14 {offsets = [0, 96], sizes = [8, 32], strides = [1, 1]} : vector<8x128xf32> to vector<8x32xf32>
    %30 = arith.negf %29 : vector<8x32xf32>
    %31 = math.exp %30 : vector<8x32xf32>
    %cst_16 = arith.constant 1.000000e+00 : f32
    %32 = vector.broadcast %cst_16 : f32 to vector<8x32xf32>
    %33 = arith.addf %32, %31 : vector<8x32xf32>
    %34 = arith.divf %32, %33 : vector<8x32xf32>
    %35 = arith.mulf %26, %8 : vector<8x32xf32>
    %36 = arith.mulf %20, %28 : vector<8x32xf32>
    %37 = arith.addf %35, %36 : vector<8x32xf32>
    %38 = math.tanh %37 : vector<8x32xf32>
    %39 = arith.mulf %34, %38 : vector<8x32xf32>
    %c0_17 = arith.constant 0 : index
    %c0_18 = arith.constant 0 : index
    %40 = vector.load %arg6[%c0_17, %c0_18] : memref<256x32xf32, #tpu.memory_space<vmem>>, vector<32x32xf32>
    %cst_19 = arith.constant dense<0.000000e+00> : vector<8x32xf32>
    %41 = tpu.matmul %39, %40, %cst_19 {dimension_numbers = #tpu.dot_dimension_numbers<[1], [0], [0], [1], [0, 0, 1, 1], [], []>} : vector<8x32xf32>, vector<32x32xf32>, vector<8x32xf32> -> vector<8x32xf32>
    %42 = arith.addf %11, %41 : vector<8x32xf32>
    %43 = vector.extract_strided_slice %5 {offsets = [0, 128], sizes = [8, 128], strides = [1, 1]} : vector<8x1024xf32> to vector<8x128xf32>
    %cst_20 = arith.constant dense<0.000000e+00> : vector<8x128xf32>
    %44 = tpu.matmul %39, %6, %cst_20 {dimension_numbers = #tpu.dot_dimension_numbers<[1], [0], [0], [1], [0, 0, 1, 1], [], []>} : vector<8x32xf32>, vector<32x128xf32>, vector<8x128xf32> -> vector<8x128xf32>
    %45 = arith.addf %43, %44 : vector<8x128xf32>
    %46 = vector.extract_strided_slice %45 {offsets = [0, 0], sizes = [8, 32], strides = [1, 1]} : vector<8x128xf32> to vector<8x32xf32>
    %47 = arith.negf %46 : vector<8x32xf32>
    %48 = math.exp %47 : vector<8x32xf32>
    %cst_21 = arith.constant 1.000000e+00 : f32
    %49 = vector.broadcast %cst_21 : f32 to vector<8x32xf32>
    %50 = arith.addf %49, %48 : vector<8x32xf32>
    %51 = arith.divf %49, %50 : vector<8x32xf32>
    %52 = vector.extract_strided_slice %45 {offsets = [0, 32], sizes = [8, 32], strides = [1, 1]} : vector<8x128xf32> to vector<8x32xf32>
    %53 = arith.negf %52 : vector<8x32xf32>
    %54 = math.exp %53 : vector<8x32xf32>
    %cst_22 = arith.constant 1.000000e+00 : f32
    %55 = vector.broadcast %cst_22 : f32 to vector<8x32xf32>
    %56 = arith.addf %55, %54 : vector<8x32xf32>
    %57 = arith.divf %55, %56 : vector<8x32xf32>
    %58 = vector.extract_strided_slice %45 {offsets = [0, 64], sizes = [8, 32], strides = [1, 1]} : vector<8x128xf32> to vector<8x32xf32>
    %59 = math.tanh %58 : vector<8x32xf32>
    %60 = vector.extract_strided_slice %45 {offsets = [0, 96], sizes = [8, 32], strides = [1, 1]} : vector<8x128xf32> to vector<8x32xf32>
    %61 = arith.negf %60 : vector<8x32xf32>
    %62 = math.exp %61 : vector<8x32xf32>
    %cst_23 = arith.constant 1.000000e+00 : f32
    %63 = vector.broadcast %cst_23 : f32 to vector<8x32xf32>
    %64 = arith.addf %63, %62 : vector<8x32xf32>
    %65 = arith.divf %63, %64 : vector<8x32xf32>
    %66 = arith.mulf %57, %37 : vector<8x32xf32>
    %67 = arith.mulf %51, %59 : vector<8x32xf32>
    %68 = arith.addf %66, %67 : vector<8x32xf32>
    %69 = math.tanh %68 : vector<8x32xf32>
    %70 = arith.mulf %65, %69 : vector<8x32xf32>
    %c32 = arith.constant 32 : index
    %c0_24 = arith.constant 0 : index
    %71 = vector.load %arg6[%c32, %c0_24] : memref<256x32xf32, #tpu.memory_space<vmem>>, vector<32x32xf32>
    %cst_25 = arith.constant dense<0.000000e+00> : vector<8x32xf32>
    %72 = tpu.matmul %70, %71, %cst_25 {dimension_numbers = #tpu.dot_dimension_numbers<[1], [0], [0], [1], [0, 0, 1, 1], [], []>} : vector<8x32xf32>, vector<32x32xf32>, vector<8x32xf32> -> vector<8x32xf32>
    %73 = arith.addf %42, %72 : vector<8x32xf32>
    %74 = vector.extract_strided_slice %5 {offsets = [0, 256], sizes = [8, 128], strides = [1, 1]} : vector<8x1024xf32> to vector<8x128xf32>
    %cst_26 = arith.constant dense<0.000000e+00> : vector<8x128xf32>
    %75 = tpu.matmul %70, %6, %cst_26 {dimension_numbers = #tpu.dot_dimension_numbers<[1], [0], [0], [1], [0, 0, 1, 1], [], []>} : vector<8x32xf32>, vector<32x128xf32>, vector<8x128xf32> -> vector<8x128xf32>
    %76 = arith.addf %74, %75 : vector<8x128xf32>
    %77 = vector.extract_strided_slice %76 {offsets = [0, 0], sizes = [8, 32], strides = [1, 1]} : vector<8x128xf32> to vector<8x32xf32>
    %78 = arith.negf %77 : vector<8x32xf32>
    %79 = math.exp %78 : vector<8x32xf32>
    %cst_27 = arith.constant 1.000000e+00 : f32
    %80 = vector.broadcast %cst_27 : f32 to vector<8x32xf32>
    %81 = arith.addf %80, %79 : vector<8x32xf32>
    %82 = arith.divf %80, %81 : vector<8x32xf32>
    %83 = vector.extract_strided_slice %76 {offsets = [0, 32], sizes = [8, 32], strides = [1, 1]} : vector<8x128xf32> to vector<8x32xf32>
    %84 = arith.negf %83 : vector<8x32xf32>
    %85 = math.exp %84 : vector<8x32xf32>
    %cst_28 = arith.constant 1.000000e+00 : f32
    %86 = vector.broadcast %cst_28 : f32 to vector<8x32xf32>
    %87 = arith.addf %86, %85 : vector<8x32xf32>
    %88 = arith.divf %86, %87 : vector<8x32xf32>
    %89 = vector.extract_strided_slice %76 {offsets = [0, 64], sizes = [8, 32], strides = [1, 1]} : vector<8x128xf32> to vector<8x32xf32>
    %90 = math.tanh %89 : vector<8x32xf32>
    %91 = vector.extract_strided_slice %76 {offsets = [0, 96], sizes = [8, 32], strides = [1, 1]} : vector<8x128xf32> to vector<8x32xf32>
    %92 = arith.negf %91 : vector<8x32xf32>
    %93 = math.exp %92 : vector<8x32xf32>
    %cst_29 = arith.constant 1.000000e+00 : f32
    %94 = vector.broadcast %cst_29 : f32 to vector<8x32xf32>
    %95 = arith.addf %94, %93 : vector<8x32xf32>
    %96 = arith.divf %94, %95 : vector<8x32xf32>
    %97 = arith.mulf %88, %68 : vector<8x32xf32>
    %98 = arith.mulf %82, %90 : vector<8x32xf32>
    %99 = arith.addf %97, %98 : vector<8x32xf32>
    %100 = math.tanh %99 : vector<8x32xf32>
    %101 = arith.mulf %96, %100 : vector<8x32xf32>
    %c64 = arith.constant 64 : index
    %c0_30 = arith.constant 0 : index
    %102 = vector.load %arg6[%c64, %c0_30] : memref<256x32xf32, #tpu.memory_space<vmem>>, vector<32x32xf32>
    %cst_31 = arith.constant dense<0.000000e+00> : vector<8x32xf32>
    %103 = tpu.matmul %101, %102, %cst_31 {dimension_numbers = #tpu.dot_dimension_numbers<[1], [0], [0], [1], [0, 0, 1, 1], [], []>} : vector<8x32xf32>, vector<32x32xf32>, vector<8x32xf32> -> vector<8x32xf32>
    %104 = arith.addf %73, %103 : vector<8x32xf32>
    %105 = vector.extract_strided_slice %5 {offsets = [0, 384], sizes = [8, 128], strides = [1, 1]} : vector<8x1024xf32> to vector<8x128xf32>
    %cst_32 = arith.constant dense<0.000000e+00> : vector<8x128xf32>
    %106 = tpu.matmul %101, %6, %cst_32 {dimension_numbers = #tpu.dot_dimension_numbers<[1], [0], [0], [1], [0, 0, 1, 1], [], []>} : vector<8x32xf32>, vector<32x128xf32>, vector<8x128xf32> -> vector<8x128xf32>
    %107 = arith.addf %105, %106 : vector<8x128xf32>
    %108 = vector.extract_strided_slice %107 {offsets = [0, 0], sizes = [8, 32], strides = [1, 1]} : vector<8x128xf32> to vector<8x32xf32>
    %109 = arith.negf %108 : vector<8x32xf32>
    %110 = math.exp %109 : vector<8x32xf32>
    %cst_33 = arith.constant 1.000000e+00 : f32
    %111 = vector.broadcast %cst_33 : f32 to vector<8x32xf32>
    %112 = arith.addf %111, %110 : vector<8x32xf32>
    %113 = arith.divf %111, %112 : vector<8x32xf32>
    %114 = vector.extract_strided_slice %107 {offsets = [0, 32], sizes = [8, 32], strides = [1, 1]} : vector<8x128xf32> to vector<8x32xf32>
    %115 = arith.negf %114 : vector<8x32xf32>
    %116 = math.exp %115 : vector<8x32xf32>
    %cst_34 = arith.constant 1.000000e+00 : f32
    %117 = vector.broadcast %cst_34 : f32 to vector<8x32xf32>
    %118 = arith.addf %117, %116 : vector<8x32xf32>
    %119 = arith.divf %117, %118 : vector<8x32xf32>
    %120 = vector.extract_strided_slice %107 {offsets = [0, 64], sizes = [8, 32], strides = [1, 1]} : vector<8x128xf32> to vector<8x32xf32>
    %121 = math.tanh %120 : vector<8x32xf32>
    %122 = vector.extract_strided_slice %107 {offsets = [0, 96], sizes = [8, 32], strides = [1, 1]} : vector<8x128xf32> to vector<8x32xf32>
    %123 = arith.negf %122 : vector<8x32xf32>
    %124 = math.exp %123 : vector<8x32xf32>
    %cst_35 = arith.constant 1.000000e+00 : f32
    %125 = vector.broadcast %cst_35 : f32 to vector<8x32xf32>
    %126 = arith.addf %125, %124 : vector<8x32xf32>
    %127 = arith.divf %125, %126 : vector<8x32xf32>
    %128 = arith.mulf %119, %99 : vector<8x32xf32>
    %129 = arith.mulf %113, %121 : vector<8x32xf32>
    %130 = arith.addf %128, %129 : vector<8x32xf32>
    %131 = math.tanh %130 : vector<8x32xf32>
    %132 = arith.mulf %127, %131 : vector<8x32xf32>
    %c96 = arith.constant 96 : index
    %c0_36 = arith.constant 0 : index
    %133 = vector.load %arg6[%c96, %c0_36] : memref<256x32xf32, #tpu.memory_space<vmem>>, vector<32x32xf32>
    %cst_37 = arith.constant dense<0.000000e+00> : vector<8x32xf32>
    %134 = tpu.matmul %132, %133, %cst_37 {dimension_numbers = #tpu.dot_dimension_numbers<[1], [0], [0], [1], [0, 0, 1, 1], [], []>} : vector<8x32xf32>, vector<32x32xf32>, vector<8x32xf32> -> vector<8x32xf32>
    %135 = arith.addf %104, %134 : vector<8x32xf32>
    %136 = vector.extract_strided_slice %5 {offsets = [0, 512], sizes = [8, 128], strides = [1, 1]} : vector<8x1024xf32> to vector<8x128xf32>
    %cst_38 = arith.constant dense<0.000000e+00> : vector<8x128xf32>
    %137 = tpu.matmul %132, %6, %cst_38 {dimension_numbers = #tpu.dot_dimension_numbers<[1], [0], [0], [1], [0, 0, 1, 1], [], []>} : vector<8x32xf32>, vector<32x128xf32>, vector<8x128xf32> -> vector<8x128xf32>
    %138 = arith.addf %136, %137 : vector<8x128xf32>
    %139 = vector.extract_strided_slice %138 {offsets = [0, 0], sizes = [8, 32], strides = [1, 1]} : vector<8x128xf32> to vector<8x32xf32>
    %140 = arith.negf %139 : vector<8x32xf32>
    %141 = math.exp %140 : vector<8x32xf32>
    %cst_39 = arith.constant 1.000000e+00 : f32
    %142 = vector.broadcast %cst_39 : f32 to vector<8x32xf32>
    %143 = arith.addf %142, %141 : vector<8x32xf32>
    %144 = arith.divf %142, %143 : vector<8x32xf32>
    %145 = vector.extract_strided_slice %138 {offsets = [0, 32], sizes = [8, 32], strides = [1, 1]} : vector<8x128xf32> to vector<8x32xf32>
    %146 = arith.negf %145 : vector<8x32xf32>
    %147 = math.exp %146 : vector<8x32xf32>
    %cst_40 = arith.constant 1.000000e+00 : f32
    %148 = vector.broadcast %cst_40 : f32 to vector<8x32xf32>
    %149 = arith.addf %148, %147 : vector<8x32xf32>
    %150 = arith.divf %148, %149 : vector<8x32xf32>
    %151 = vector.extract_strided_slice %138 {offsets = [0, 64], sizes = [8, 32], strides = [1, 1]} : vector<8x128xf32> to vector<8x32xf32>
    %152 = math.tanh %151 : vector<8x32xf32>
    %153 = vector.extract_strided_slice %138 {offsets = [0, 96], sizes = [8, 32], strides = [1, 1]} : vector<8x128xf32> to vector<8x32xf32>
    %154 = arith.negf %153 : vector<8x32xf32>
    %155 = math.exp %154 : vector<8x32xf32>
    %cst_41 = arith.constant 1.000000e+00 : f32
    %156 = vector.broadcast %cst_41 : f32 to vector<8x32xf32>
    %157 = arith.addf %156, %155 : vector<8x32xf32>
    %158 = arith.divf %156, %157 : vector<8x32xf32>
    %159 = arith.mulf %150, %130 : vector<8x32xf32>
    %160 = arith.mulf %144, %152 : vector<8x32xf32>
    %161 = arith.addf %159, %160 : vector<8x32xf32>
    %162 = math.tanh %161 : vector<8x32xf32>
    %163 = arith.mulf %158, %162 : vector<8x32xf32>
    %c128 = arith.constant 128 : index
    %c0_42 = arith.constant 0 : index
    %164 = vector.load %arg6[%c128, %c0_42] : memref<256x32xf32, #tpu.memory_space<vmem>>, vector<32x32xf32>
    %cst_43 = arith.constant dense<0.000000e+00> : vector<8x32xf32>
    %165 = tpu.matmul %163, %164, %cst_43 {dimension_numbers = #tpu.dot_dimension_numbers<[1], [0], [0], [1], [0, 0, 1, 1], [], []>} : vector<8x32xf32>, vector<32x32xf32>, vector<8x32xf32> -> vector<8x32xf32>
    %166 = arith.addf %135, %165 : vector<8x32xf32>
    %167 = vector.extract_strided_slice %5 {offsets = [0, 640], sizes = [8, 128], strides = [1, 1]} : vector<8x1024xf32> to vector<8x128xf32>
    %cst_44 = arith.constant dense<0.000000e+00> : vector<8x128xf32>
    %168 = tpu.matmul %163, %6, %cst_44 {dimension_numbers = #tpu.dot_dimension_numbers<[1], [0], [0], [1], [0, 0, 1, 1], [], []>} : vector<8x32xf32>, vector<32x128xf32>, vector<8x128xf32> -> vector<8x128xf32>
    %169 = arith.addf %167, %168 : vector<8x128xf32>
    %170 = vector.extract_strided_slice %169 {offsets = [0, 0], sizes = [8, 32], strides = [1, 1]} : vector<8x128xf32> to vector<8x32xf32>
    %171 = arith.negf %170 : vector<8x32xf32>
    %172 = math.exp %171 : vector<8x32xf32>
    %cst_45 = arith.constant 1.000000e+00 : f32
    %173 = vector.broadcast %cst_45 : f32 to vector<8x32xf32>
    %174 = arith.addf %173, %172 : vector<8x32xf32>
    %175 = arith.divf %173, %174 : vector<8x32xf32>
    %176 = vector.extract_strided_slice %169 {offsets = [0, 32], sizes = [8, 32], strides = [1, 1]} : vector<8x128xf32> to vector<8x32xf32>
    %177 = arith.negf %176 : vector<8x32xf32>
    %178 = math.exp %177 : vector<8x32xf32>
    %cst_46 = arith.constant 1.000000e+00 : f32
    %179 = vector.broadcast %cst_46 : f32 to vector<8x32xf32>
    %180 = arith.addf %179, %178 : vector<8x32xf32>
    %181 = arith.divf %179, %180 : vector<8x32xf32>
    %182 = vector.extract_strided_slice %169 {offsets = [0, 64], sizes = [8, 32], strides = [1, 1]} : vector<8x128xf32> to vector<8x32xf32>
    %183 = math.tanh %182 : vector<8x32xf32>
    %184 = vector.extract_strided_slice %169 {offsets = [0, 96], sizes = [8, 32], strides = [1, 1]} : vector<8x128xf32> to vector<8x32xf32>
    %185 = arith.negf %184 : vector<8x32xf32>
    %186 = math.exp %185 : vector<8x32xf32>
    %cst_47 = arith.constant 1.000000e+00 : f32
    %187 = vector.broadcast %cst_47 : f32 to vector<8x32xf32>
    %188 = arith.addf %187, %186 : vector<8x32xf32>
    %189 = arith.divf %187, %188 : vector<8x32xf32>
    %190 = arith.mulf %181, %161 : vector<8x32xf32>
    %191 = arith.mulf %175, %183 : vector<8x32xf32>
    %192 = arith.addf %190, %191 : vector<8x32xf32>
    %193 = math.tanh %192 : vector<8x32xf32>
    %194 = arith.mulf %189, %193 : vector<8x32xf32>
    %c160 = arith.constant 160 : index
    %c0_48 = arith.constant 0 : index
    %195 = vector.load %arg6[%c160, %c0_48] : memref<256x32xf32, #tpu.memory_space<vmem>>, vector<32x32xf32>
    %cst_49 = arith.constant dense<0.000000e+00> : vector<8x32xf32>
    %196 = tpu.matmul %194, %195, %cst_49 {dimension_numbers = #tpu.dot_dimension_numbers<[1], [0], [0], [1], [0, 0, 1, 1], [], []>} : vector<8x32xf32>, vector<32x32xf32>, vector<8x32xf32> -> vector<8x32xf32>
    %197 = arith.addf %166, %196 : vector<8x32xf32>
    %198 = vector.extract_strided_slice %5 {offsets = [0, 768], sizes = [8, 128], strides = [1, 1]} : vector<8x1024xf32> to vector<8x128xf32>
    %cst_50 = arith.constant dense<0.000000e+00> : vector<8x128xf32>
    %199 = tpu.matmul %194, %6, %cst_50 {dimension_numbers = #tpu.dot_dimension_numbers<[1], [0], [0], [1], [0, 0, 1, 1], [], []>} : vector<8x32xf32>, vector<32x128xf32>, vector<8x128xf32> -> vector<8x128xf32>
    %200 = arith.addf %198, %199 : vector<8x128xf32>
    %201 = vector.extract_strided_slice %200 {offsets = [0, 0], sizes = [8, 32], strides = [1, 1]} : vector<8x128xf32> to vector<8x32xf32>
    %202 = arith.negf %201 : vector<8x32xf32>
    %203 = math.exp %202 : vector<8x32xf32>
    %cst_51 = arith.constant 1.000000e+00 : f32
    %204 = vector.broadcast %cst_51 : f32 to vector<8x32xf32>
    %205 = arith.addf %204, %203 : vector<8x32xf32>
    %206 = arith.divf %204, %205 : vector<8x32xf32>
    %207 = vector.extract_strided_slice %200 {offsets = [0, 32], sizes = [8, 32], strides = [1, 1]} : vector<8x128xf32> to vector<8x32xf32>
    %208 = arith.negf %207 : vector<8x32xf32>
    %209 = math.exp %208 : vector<8x32xf32>
    %cst_52 = arith.constant 1.000000e+00 : f32
    %210 = vector.broadcast %cst_52 : f32 to vector<8x32xf32>
    %211 = arith.addf %210, %209 : vector<8x32xf32>
    %212 = arith.divf %210, %211 : vector<8x32xf32>
    %213 = vector.extract_strided_slice %200 {offsets = [0, 64], sizes = [8, 32], strides = [1, 1]} : vector<8x128xf32> to vector<8x32xf32>
    %214 = math.tanh %213 : vector<8x32xf32>
    %215 = vector.extract_strided_slice %200 {offsets = [0, 96], sizes = [8, 32], strides = [1, 1]} : vector<8x128xf32> to vector<8x32xf32>
    %216 = arith.negf %215 : vector<8x32xf32>
    %217 = math.exp %216 : vector<8x32xf32>
    %cst_53 = arith.constant 1.000000e+00 : f32
    %218 = vector.broadcast %cst_53 : f32 to vector<8x32xf32>
    %219 = arith.addf %218, %217 : vector<8x32xf32>
    %220 = arith.divf %218, %219 : vector<8x32xf32>
    %221 = arith.mulf %212, %192 : vector<8x32xf32>
    %222 = arith.mulf %206, %214 : vector<8x32xf32>
    %223 = arith.addf %221, %222 : vector<8x32xf32>
    %224 = math.tanh %223 : vector<8x32xf32>
    %225 = arith.mulf %220, %224 : vector<8x32xf32>
    %c192 = arith.constant 192 : index
    %c0_54 = arith.constant 0 : index
    %226 = vector.load %arg6[%c192, %c0_54] : memref<256x32xf32, #tpu.memory_space<vmem>>, vector<32x32xf32>
    %cst_55 = arith.constant dense<0.000000e+00> : vector<8x32xf32>
    %227 = tpu.matmul %225, %226, %cst_55 {dimension_numbers = #tpu.dot_dimension_numbers<[1], [0], [0], [1], [0, 0, 1, 1], [], []>} : vector<8x32xf32>, vector<32x32xf32>, vector<8x32xf32> -> vector<8x32xf32>
    %228 = arith.addf %197, %227 : vector<8x32xf32>
    %229 = vector.extract_strided_slice %5 {offsets = [0, 896], sizes = [8, 128], strides = [1, 1]} : vector<8x1024xf32> to vector<8x128xf32>
    %cst_56 = arith.constant dense<0.000000e+00> : vector<8x128xf32>
    %230 = tpu.matmul %225, %6, %cst_56 {dimension_numbers = #tpu.dot_dimension_numbers<[1], [0], [0], [1], [0, 0, 1, 1], [], []>} : vector<8x32xf32>, vector<32x128xf32>, vector<8x128xf32> -> vector<8x128xf32>
    %231 = arith.addf %229, %230 : vector<8x128xf32>
    %232 = vector.extract_strided_slice %231 {offsets = [0, 0], sizes = [8, 32], strides = [1, 1]} : vector<8x128xf32> to vector<8x32xf32>
    %233 = arith.negf %232 : vector<8x32xf32>
    %234 = math.exp %233 : vector<8x32xf32>
    %cst_57 = arith.constant 1.000000e+00 : f32
    %235 = vector.broadcast %cst_57 : f32 to vector<8x32xf32>
    %236 = arith.addf %235, %234 : vector<8x32xf32>
    %237 = arith.divf %235, %236 : vector<8x32xf32>
    %238 = vector.extract_strided_slice %231 {offsets = [0, 32], sizes = [8, 32], strides = [1, 1]} : vector<8x128xf32> to vector<8x32xf32>
    %239 = arith.negf %238 : vector<8x32xf32>
    %240 = math.exp %239 : vector<8x32xf32>
    %cst_58 = arith.constant 1.000000e+00 : f32
    %241 = vector.broadcast %cst_58 : f32 to vector<8x32xf32>
    %242 = arith.addf %241, %240 : vector<8x32xf32>
    %243 = arith.divf %241, %242 : vector<8x32xf32>
    %244 = vector.extract_strided_slice %231 {offsets = [0, 64], sizes = [8, 32], strides = [1, 1]} : vector<8x128xf32> to vector<8x32xf32>
    %245 = math.tanh %244 : vector<8x32xf32>
    %246 = vector.extract_strided_slice %231 {offsets = [0, 96], sizes = [8, 32], strides = [1, 1]} : vector<8x128xf32> to vector<8x32xf32>
    %247 = arith.negf %246 : vector<8x32xf32>
    %248 = math.exp %247 : vector<8x32xf32>
    %cst_59 = arith.constant 1.000000e+00 : f32
    %249 = vector.broadcast %cst_59 : f32 to vector<8x32xf32>
    %250 = arith.addf %249, %248 : vector<8x32xf32>
    %251 = arith.divf %249, %250 : vector<8x32xf32>
    %252 = arith.mulf %243, %223 : vector<8x32xf32>
    %253 = arith.mulf %237, %245 : vector<8x32xf32>
    %254 = arith.addf %252, %253 : vector<8x32xf32>
    %255 = math.tanh %254 : vector<8x32xf32>
    %256 = arith.mulf %251, %255 : vector<8x32xf32>
    %c224 = arith.constant 224 : index
    %c0_60 = arith.constant 0 : index
    %257 = vector.load %arg6[%c224, %c0_60] : memref<256x32xf32, #tpu.memory_space<vmem>>, vector<32x32xf32>
    %cst_61 = arith.constant dense<0.000000e+00> : vector<8x32xf32>
    %258 = tpu.matmul %256, %257, %cst_61 {dimension_numbers = #tpu.dot_dimension_numbers<[1], [0], [0], [1], [0, 0, 1, 1], [], []>} : vector<8x32xf32>, vector<32x32xf32>, vector<8x32xf32> -> vector<8x32xf32>
    %259 = arith.addf %228, %258 : vector<8x32xf32>
    %c0_62 = arith.constant 0 : index
    %c0_63 = arith.constant 0 : index
    %260 = vector.load %arg8[%c0_62, %c0_63] : memref<1x32xf32, #tpu.memory_space<vmem>>, vector<1x32xf32>
    %c0_64 = arith.constant 0 : index
    %c0_65 = arith.constant 0 : index
    %261 = vector.load %arg9[%c0_64, %c0_65] : memref<1x32xf32, #tpu.memory_space<vmem>>, vector<1x32xf32>
    %cst_66 = arith.constant dense<0.000000e+00> : vector<32xf32>
    %262 = vector.multi_reduction <add>, %259, %cst_66 [0] : vector<8x32xf32> to vector<32xf32>
    %263 = vector.shape_cast %262 : vector<32xf32> to vector<1x32xf32>
    %cst_67 = arith.constant 8.000000e+00 : f32
    %264 = vector.broadcast %cst_67 : f32 to vector<1x32xf32>
    %265 = arith.divf %263, %264 : vector<1x32xf32>
    %266 = vector.broadcast %265 : vector<1x32xf32> to vector<8x32xf32>
    %267 = arith.subf %259, %266 : vector<8x32xf32>
    %268 = arith.mulf %267, %267 : vector<8x32xf32>
    %cst_68 = arith.constant dense<0.000000e+00> : vector<32xf32>
    %269 = vector.multi_reduction <add>, %268, %cst_68 [0] : vector<8x32xf32> to vector<32xf32>
    %270 = vector.shape_cast %269 : vector<32xf32> to vector<1x32xf32>
    %cst_69 = arith.constant 8.000000e+00 : f32
    %271 = vector.broadcast %cst_69 : f32 to vector<1x32xf32>
    %272 = arith.divf %270, %271 : vector<1x32xf32>
    %cst_70 = arith.constant 9.99999974E-6 : f32
    %273 = vector.broadcast %cst_70 : f32 to vector<1x32xf32>
    %274 = arith.addf %272, %273 : vector<1x32xf32>
    %275 = math.rsqrt %274 : vector<1x32xf32>
    %276 = arith.mulf %260, %275 : vector<1x32xf32>
    %277 = vector.broadcast %276 : vector<1x32xf32> to vector<8x32xf32>
    %278 = arith.mulf %259, %277 : vector<8x32xf32>
    %279 = arith.mulf %265, %276 : vector<1x32xf32>
    %280 = arith.subf %261, %279 : vector<1x32xf32>
    %281 = vector.broadcast %280 : vector<1x32xf32> to vector<8x32xf32>
    %282 = arith.addf %278, %281 : vector<8x32xf32>
    %cst_71 = arith.constant 0.000000e+00 : f32
    %283 = vector.broadcast %cst_71 : f32 to vector<8x32xf32>
    %284 = arith.maximumf %282, %283 : vector<8x32xf32>
    %c0_72 = arith.constant 0 : index
    %c0_73 = arith.constant 0 : index
    %285 = vector.load %arg10[%c0_72, %c0_73] : memref<32x32xf32, #tpu.memory_space<vmem>>, vector<32x32xf32>
    %cst_74 = arith.constant dense<0.000000e+00> : vector<8x32xf32>
    %286 = tpu.matmul %284, %285, %cst_74 {dimension_numbers = #tpu.dot_dimension_numbers<[1], [0], [0], [1], [0, 0, 1, 1], [], []>} : vector<8x32xf32>, vector<32x32xf32>, vector<8x32xf32> -> vector<8x32xf32>
    %c0_75 = arith.constant 0 : index
    %c0_76 = arith.constant 0 : index
    %287 = vector.load %arg11[%c0_75, %c0_76] : memref<1x32xf32, #tpu.memory_space<vmem>>, vector<1x32xf32>
    %288 = vector.broadcast %287 : vector<1x32xf32> to vector<8x32xf32>
    %289 = arith.addf %286, %288 : vector<8x32xf32>
    %c0_77 = arith.constant 0 : index
    %c0_78 = arith.constant 0 : index
    %290 = vector.load %arg12[%c0_77, %c0_78] : memref<1x32xf32, #tpu.memory_space<vmem>>, vector<1x32xf32>
    %c0_79 = arith.constant 0 : index
    %c0_80 = arith.constant 0 : index
    %291 = vector.load %arg13[%c0_79, %c0_80] : memref<1x32xf32, #tpu.memory_space<vmem>>, vector<1x32xf32>
    %cst_81 = arith.constant dense<0.000000e+00> : vector<32xf32>
    %292 = vector.multi_reduction <add>, %289, %cst_81 [0] : vector<8x32xf32> to vector<32xf32>
    %293 = vector.shape_cast %292 : vector<32xf32> to vector<1x32xf32>
    %cst_82 = arith.constant 8.000000e+00 : f32
    %294 = vector.broadcast %cst_82 : f32 to vector<1x32xf32>
    %295 = arith.divf %293, %294 : vector<1x32xf32>
    %296 = vector.broadcast %295 : vector<1x32xf32> to vector<8x32xf32>
    %297 = arith.subf %289, %296 : vector<8x32xf32>
    %298 = arith.mulf %297, %297 : vector<8x32xf32>
    %cst_83 = arith.constant dense<0.000000e+00> : vector<32xf32>
    %299 = vector.multi_reduction <add>, %298, %cst_83 [0] : vector<8x32xf32> to vector<32xf32>
    %300 = vector.shape_cast %299 : vector<32xf32> to vector<1x32xf32>
    %cst_84 = arith.constant 8.000000e+00 : f32
    %301 = vector.broadcast %cst_84 : f32 to vector<1x32xf32>
    %302 = arith.divf %300, %301 : vector<1x32xf32>
    %cst_85 = arith.constant 9.99999974E-6 : f32
    %303 = vector.broadcast %cst_85 : f32 to vector<1x32xf32>
    %304 = arith.addf %302, %303 : vector<1x32xf32>
    %305 = math.rsqrt %304 : vector<1x32xf32>
    %306 = arith.mulf %290, %305 : vector<1x32xf32>
    %307 = vector.broadcast %306 : vector<1x32xf32> to vector<8x32xf32>
    %308 = arith.mulf %289, %307 : vector<8x32xf32>
    %309 = arith.mulf %295, %306 : vector<1x32xf32>
    %310 = arith.subf %291, %309 : vector<1x32xf32>
    %311 = vector.broadcast %310 : vector<1x32xf32> to vector<8x32xf32>
    %312 = arith.addf %308, %311 : vector<8x32xf32>
    %313 = math.tanh %312 : vector<8x32xf32>
    %c0_86 = arith.constant 0 : index
    %c0_87 = arith.constant 0 : index
    %314 = vector.load %arg14[%c0_86, %c0_87] : memref<32x12xf32, #tpu.memory_space<vmem>>, vector<32x12xf32>
    %cst_88 = arith.constant dense<0.000000e+00> : vector<8x12xf32>
    %315 = tpu.matmul %313, %314, %cst_88 {dimension_numbers = #tpu.dot_dimension_numbers<[1], [0], [0], [1], [0, 0, 1, 1], [], []>} : vector<8x32xf32>, vector<32x12xf32>, vector<8x12xf32> -> vector<8x12xf32>
    %c0_89 = arith.constant 0 : index
    %c0_90 = arith.constant 0 : index
    %316 = vector.load %arg15[%c0_89, %c0_90] : memref<1x12xf32, #tpu.memory_space<vmem>>, vector<1x12xf32>
    %317 = vector.broadcast %316 : vector<1x12xf32> to vector<8x12xf32>
    %318 = arith.addf %315, %317 : vector<8x12xf32>
    %c0_91 = arith.constant 0 : index
    %c0_92 = arith.constant 0 : index
    %319 = vector.load %arg16[%c0_91, %c0_92] : memref<1x12xf32, #tpu.memory_space<vmem>>, vector<1x12xf32>
    %c0_93 = arith.constant 0 : index
    %c0_94 = arith.constant 0 : index
    %320 = vector.load %arg17[%c0_93, %c0_94] : memref<1x12xf32, #tpu.memory_space<vmem>>, vector<1x12xf32>
    %cst_95 = arith.constant dense<0.000000e+00> : vector<12xf32>
    %321 = vector.multi_reduction <add>, %318, %cst_95 [0] : vector<8x12xf32> to vector<12xf32>
    %322 = vector.shape_cast %321 : vector<12xf32> to vector<1x12xf32>
    %cst_96 = arith.constant 8.000000e+00 : f32
    %323 = vector.broadcast %cst_96 : f32 to vector<1x12xf32>
    %324 = arith.divf %322, %323 : vector<1x12xf32>
    %325 = vector.broadcast %324 : vector<1x12xf32> to vector<8x12xf32>
    %326 = arith.subf %318, %325 : vector<8x12xf32>
    %327 = arith.mulf %326, %326 : vector<8x12xf32>
    %cst_97 = arith.constant dense<0.000000e+00> : vector<12xf32>
    %328 = vector.multi_reduction <add>, %327, %cst_97 [0] : vector<8x12xf32> to vector<12xf32>
    %329 = vector.shape_cast %328 : vector<12xf32> to vector<1x12xf32>
    %cst_98 = arith.constant 8.000000e+00 : f32
    %330 = vector.broadcast %cst_98 : f32 to vector<1x12xf32>
    %331 = arith.divf %329, %330 : vector<1x12xf32>
    %cst_99 = arith.constant 9.99999974E-6 : f32
    %332 = vector.broadcast %cst_99 : f32 to vector<1x12xf32>
    %333 = arith.addf %331, %332 : vector<1x12xf32>
    %334 = math.rsqrt %333 : vector<1x12xf32>
    %335 = arith.mulf %319, %334 : vector<1x12xf32>
    %336 = vector.broadcast %335 : vector<1x12xf32> to vector<8x12xf32>
    %337 = arith.mulf %318, %336 : vector<8x12xf32>
    %338 = arith.mulf %324, %335 : vector<1x12xf32>
    %339 = arith.subf %320, %338 : vector<1x12xf32>
    %340 = vector.broadcast %339 : vector<1x12xf32> to vector<8x12xf32>
    %341 = arith.addf %337, %340 : vector<8x12xf32>
    %cst_100 = arith.constant dense<0xFF800000> : vector<8xf32>
    %342 = vector.multi_reduction <maximumf>, %341, %cst_100 [1] : vector<8x12xf32> to vector<8xf32>
    %343 = vector.shape_cast %342 : vector<8xf32> to vector<8x1xf32>
    %344 = vector.broadcast %343 : vector<8x1xf32> to vector<8x12xf32>
    %345 = arith.subf %341, %344 : vector<8x12xf32>
    %346 = math.exp %345 : vector<8x12xf32>
    %cst_101 = arith.constant dense<0.000000e+00> : vector<8xf32>
    %347 = vector.multi_reduction <add>, %346, %cst_101 [1] : vector<8x12xf32> to vector<8xf32>
    %348 = vector.shape_cast %347 : vector<8xf32> to vector<8x1xf32>
    %349 = tpu.reciprocal %348 : vector<8x1xf32> -> vector<8x1xf32>
    %350 = vector.broadcast %349 : vector<8x1xf32> to vector<8x12xf32>
    %351 = arith.mulf %346, %350 : vector<8x12xf32>
    %c0_102 = arith.constant 0 : index
    %c0_103 = arith.constant 0 : index
    %352 = vector.load %arg18[%c0_102, %c0_103] : memref<8x12xf32, #tpu.memory_space<vmem>>, vector<8x12xf32>
    tpu.vector_store %arg18[%c0_102, %c0_103], %351 {strides = array<i32>} : memref<8x12xf32, #tpu.memory_space<vmem>>, vector<8x12xf32>,
    return
  }
}

</mosaic_0001>

<llo_original>
// kernel: model_hapt_forward.1
$region0: #{model_hapt_forward.1}
  #allocation0 [shape = 'u32[]', space=smem, size = 0x4, offset = 0x4, fixed_abs, tag = 'smem constant byte address 0x4 - core index']
  #allocation1 [shape = 'u32[144,128]{1,0:T(1,128)}', space=vmem, size = 0x12000, scoped, tag = 'internal scratch']
  %s0 = inlined_call_operand.vmem [shape: f32[8,48], index: 0, kind: input, shape index: {}]
  %s1 = inlined_call_operand.vmem [shape: f32[48,1024], index: 1, kind: input, shape index: {}]
  %s2 = inlined_call_operand.vmem [shape: f32[1,1024], index: 2, kind: input, shape index: {}]
  %s3 = inlined_call_operand.vmem [shape: f32[32,128], index: 3, kind: input, shape index: {}]
  %s4 = inlined_call_operand.vmem [shape: f32[8,32], index: 4, kind: input, shape index: {}]
  %s5 = inlined_call_operand.vmem [shape: f32[8,32], index: 5, kind: input, shape index: {}]
  %s6 = inlined_call_operand.vmem [shape: f32[256,32], index: 6, kind: input, shape index: {}]
  %s7 = inlined_call_operand.vmem [shape: f32[1,32], index: 7, kind: input, shape index: {}]
  %s8 = inlined_call_operand.vmem [shape: f32[1,32], index: 8, kind: input, shape index: {}]
  %s9 = inlined_call_operand.vmem [shape: f32[1,32], index: 9, kind: input, shape index: {}]
  %s10 = inlined_call_operand.vmem [shape: f32[32,32], index: 10, kind: input, shape index: {}]
  %s11 = inlined_call_operand.vmem [shape: f32[1,32], index: 11, kind: input, shape index: {}]
  %s12 = inlined_call_operand.vmem [shape: f32[1,32], index: 12, kind: input, shape index: {}]
  %s13 = inlined_call_operand.vmem [shape: f32[1,32], index: 13, kind: input, shape index: {}]
  %s14 = inlined_call_operand.vmem [shape: f32[32,12], index: 14, kind: input, shape index: {}]
  %s15 = inlined_call_operand.vmem [shape: f32[1,12], index: 15, kind: input, shape index: {}]
  %s16 = inlined_call_operand.vmem [shape: f32[1,12], index: 16, kind: input, shape index: {}]
  %s17 = inlined_call_operand.vmem [shape: f32[1,12], index: 17, kind: input, shape index: {}]
  %s18 = inlined_call_operand.hbm [shape: f32[8,12], index: 18, kind: output, shape index: {}]
  %s19 = sld [smem:[#allocation0]]
  $region82: #{model_hapt_forward.1} parent=0
    _
  %s21 = ssub.s32 1, %s19
  %s22 = scalar_select 0, %s21, %s19
  $region1: #{model_hapt_forward.1} parent=0
    #allocation2 [shape = 'u8[4096]{0}', space=vmem, size = 0x1000, scoped, tag = 'output window, operand 0, single buffered']
    #allocation3 [shape = 's32[1]{0}', space=sflag, size = 0x4, scoped, tag = 'scoped memory for model_hapt_forward.1']
    %23 = vsyncpa [#allocation3], 0
    // Predicated region
    $region2: #{model_hapt_forward.1} parent=1 // pred_check
      _
    $region3: #{model_hapt_forward.1} parent=1 // pred_check_branch
      %25 = sbr.rel (0) target = $region5
    $region4: #{model_hapt_forward.1} parent=1 // pred_region
      _
    $region5: #{model_hapt_forward.1} parent=1 // pred_fallthru
      _
    // Predicated region
    $region6: #{model_hapt_forward.1} parent=1 // pred_check
      _
    $region7: #{model_hapt_forward.1} parent=1 // pred_check_branch
      %27 = sbr.rel (0) target = $region9
    $region8: #{model_hapt_forward.1} parent=1 // pred_region
      _
    $region9: #{model_hapt_forward.1} parent=1 // pred_fallthru
      _
    // Predicated region
    $region10: #{model_hapt_forward.1} parent=1 // pred_check
      _
    $region11: #{model_hapt_forward.1} parent=1 // pred_check_branch
      %29 = sbr.rel (0) target = $region13
    $region12: #{model_hapt_forward.1} parent=1 // pred_region
      _
    $region13: #{model_hapt_forward.1} parent=1 // pred_fallthru
      _
    // Predicated region
    $region14: #{model_hapt_forward.1} parent=1 // pred_check
      _
    $region15: #{model_hapt_forward.1} parent=1 // pred_check_branch
      %31 = sbr.rel (0) target = $region17
    $region16: #{model_hapt_forward.1} parent=1 // pred_region
      _
    $region17: #{model_hapt_forward.1} parent=1 // pred_fallthru
      _
    // Predicated region
    $region18: #{model_hapt_forward.1} parent=1 // pred_check
      _
    $region19: #{model_hapt_forward.1} parent=1 // pred_check_branch
      %33 = sbr.rel (0) target = $region21
    $region20: #{model_hapt_forward.1} parent=1 // pred_region
      _
    $region21: #{model_hapt_forward.1} parent=1 // pred_fallthru
      _
    // Predicated region
    $region22: #{model_hapt_forward.1} parent=1 // pred_check
      _
    $region23: #{model_hapt_forward.1} parent=1 // pred_check_branch
      %35 = sbr.rel (0) target = $region25
    $region24: #{model_hapt_forward.1} parent=1 // pred_region
      _
    $region25: #{model_hapt_forward.1} parent=1 // pred_fallthru
      _
    // Predicated region
    $region26: #{model_hapt_forward.1} parent=1 // pred_check
      _
    $region27: #{model_hapt_forward.1} parent=1 // pred_check_branch
      %37 = sbr.rel (0) target = $region29
    $region28: #{model_hapt_forward.1} parent=1 // pred_region
      _
    $region29: #{model_hapt_forward.1} parent=1 // pred_fallthru
      _
    // Predicated region
    $region30: #{model_hapt_forward.1} parent=1 // pred_check
      _
    $region31: #{model_hapt_forward.1} parent=1 // pred_check_branch
      %39 = sbr.rel (0) target = $region33
    $region32: #{model_hapt_forward.1} parent=1 // pred_region
      _
    $region33: #{model_hapt_forward.1} parent=1 // pred_fallthru
      _
    // Predicated region
    $region34: #{model_hapt_forward.1} parent=1 // pred_check
      _
    $region35: #{model_hapt_forward.1} parent=1 // pred_check_branch
      %41 = sbr.rel (0) target = $region37
    $region36: #{model_hapt_forward.1} parent=1 // pred_region
      _
    $region37: #{model_hapt_forward.1} parent=1 // pred_fallthru
      _
    // Predicated region
    $region38: #{model_hapt_forward.1} parent=1 // pred_check
      _
    $region39: #{model_hapt_forward.1} parent=1 // pred_check_branch
      %43 = sbr.rel (0) target = $region41
    $region40: #{model_hapt_forward.1} parent=1 // pred_region
      _
    $region41: #{model_hapt_forward.1} parent=1 // pred_fallthru
      _
    // Predicated region
    $region42: #{model_hapt_forward.1} parent=1 // pred_check
      _
    $region43: #{model_hapt_forward.1} parent=1 // pred_check_branch
      %45 = sbr.rel (0) target = $region45
    $region44: #{model_hapt_forward.1} parent=1 // pred_region
      _
    $region45: #{model_hapt_forward.1} parent=1 // pred_fallthru
      _
    // Predicated region
    $region46: #{model_hapt_forward.1} parent=1 // pred_check
      _
    $region47: #{model_hapt_forward.1} parent=1 // pred_check_branch
      %47 = sbr.rel (0) target = $region49
    $region48: #{model_hapt_forward.1} parent=1 // pred_region
      _
    $region49: #{model_hapt_forward.1} parent=1 // pred_fallthru
      _
    // Predicated region
    $region50: #{model_hapt_forward.1} parent=1 // pred_check
      _
    $region51: #{model_hapt_forward.1} parent=1 // pred_check_branch
      %49 = sbr.rel (0) target = $region53
    $region52: #{model_hapt_forward.1} parent=1 // pred_region
      _
    $region53: #{model_hapt_forward.1} parent=1 // pred_fallthru
      _
    // Predicated region
    $region54: #{model_hapt_forward.1} parent=1 // pred_check
      _
    $region55: #{model_hapt_forward.1} parent=1 // pred_check_branch
      %51 = sbr.rel (0) target = $region57
    $region56: #{model_hapt_forward.1} parent=1 // pred_region
      _
    $region57: #{model_hapt_forward.1} parent=1 // pred_fallthru
      _
    // Predicated region
    $region58: #{model_hapt_forward.1} parent=1 // pred_check
      _
    $region59: #{model_hapt_forward.1} parent=1 // pred_check_branch
      %53 = sbr.rel (0) target = $region61
    $region60: #{model_hapt_forward.1} parent=1 // pred_region
      _
    $region61: #{model_hapt_forward.1} parent=1 // pred_fallthru
      _
    // Predicated region
    $region62: #{model_hapt_forward.1} parent=1 // pred_check
      _
    $region63: #{model_hapt_forward.1} parent=1 // pred_check_branch
      %55 = sbr.rel (0) target = $region65
    $region64: #{model_hapt_forward.1} parent=1 // pred_region
      _
    $region65: #{model_hapt_forward.1} parent=1 // pred_fallthru
      _
    // Predicated region
    $region66: #{model_hapt_forward.1} parent=1 // pred_check
      _
    $region67: #{model_hapt_forward.1} parent=1 // pred_check_branch
      %57 = sbr.rel (0) target = $region69
    $region68: #{model_hapt_forward.1} parent=1 // pred_region
      _
    $region69: #{model_hapt_forward.1} parent=1 // pred_fallthru
      _
    // Predicated region
    $region70: #{model_hapt_forward.1} parent=1 // pred_check
      _
    $region71: #{model_hapt_forward.1} parent=1 // pred_check_branch
      %59 = sbr.rel (0) target = $region73
    $region72: #{model_hapt_forward.1} parent=1 // pred_region
      _
    $region73: #{model_hapt_forward.1} parent=1 // pred_fallthru
      _
    %v60 = vld [vmem:[%s0] sm:$0xff]
    %v61 = vld [vmem:[%s1] sm:$0xff]
    %v62 = vld [vmem:[%s1 + $0x8] sm:$0xff]
    %v63 = vld [vmem:[%s1 + $0x10] sm:$0xff]
    %v64 = vld [vmem:[%s1 + $0x18] sm:$0xff]
    %v65 = vld [vmem:[%s1 + $0x20] sm:$0xff]
    %v66 = vld [vmem:[%s1 + $0x28] sm:$0xff]
    %v67 = vld [vmem:[%s1 + $0x30] sm:$0xff]
    %v68 = vld [vmem:[%s1 + $0x38] sm:$0xff]
    %v69 = vld [vmem:[%s1 + $0x40] sm:$0xff]
    %v70 = vld [vmem:[%s1 + $0x48] sm:$0xff]
    %v71 = vld [vmem:[%s1 + $0x50] sm:$0xff]
    %v72 = vld [vmem:[%s1 + $0x58] sm:$0xff]
    %v73 = vld [vmem:[%s1 + $0x60] sm:$0xff]
    %v74 = vld [vmem:[%s1 + $0x68] sm:$0xff]
    %v75 = vld [vmem:[%s1 + $0x70] sm:$0xff]
    %v76 = vld [vmem:[%s1 + $0x78] sm:$0xff]
    %v77 = vld [vmem:[%s1 + $0x80] sm:$0xff]
    %v78 = vld [vmem:[%s1 + $0x88] sm:$0xff]
    %v79 = vld [vmem:[%s1 + $0x90] sm:$0xff]
    %v80 = vld [vmem:[%s1 + $0x98] sm:$0xff]
    %v81 = vld [vmem:[%s1 + $0xa0] sm:$0xff]
    %v82 = vld [vmem:[%s1 + $0xa8] sm:$0xff]
    %v83 = vld [vmem:[%s1 + $0xb0] sm:$0xff]
    %v84 = vld [vmem:[%s1 + $0xb8] sm:$0xff]
    %v85 = vld [vmem:[%s1 + $0xc0] sm:$0xff]
    %v86 = vld [vmem:[%s1 + $0xc8] sm:$0xff]
    %v87 = vld [vmem:[%s1 + $0xd0] sm:$0xff]
    %v88 = vld [vmem:[%s1 + $0xd8] sm:$0xff]
    %v89 = vld [vmem:[%s1 + $0xe0] sm:$0xff]
    %v90 = vld [vmem:[%s1 + $0xe8] sm:$0xff]
    %v91 = vld [vmem:[%s1 + $0xf0] sm:$0xff]
    %v92 = vld [vmem:[%s1 + $0xf8] sm:$0xff]
    %v93 = vld [vmem:[%s1 + $0x100] sm:$0xff]
    %v94 = vld [vmem:[%s1 + $0x108] sm:$0xff]
    %v95 = vld [vmem:[%s1 + $0x110] sm:$0xff]
    %v96 = vld [vmem:[%s1 + $0x118] sm:$0xff]
    %v97 = vld [vmem:[%s1 + $0x120] sm:$0xff]
    %v98 = vld [vmem:[%s1 + $0x128] sm:$0xff]
    %v99 = vld [vmem:[%s1 + $0x130] sm:$0xff]
    %v100 = vld [vmem:[%s1 + $0x138] sm:$0xff]
    %v101 = vld [vmem:[%s1 + $0x140] sm:$0xff]
    %v102 = vld [vmem:[%s1 + $0x148] sm:$0xff]
    %v103 = vld [vmem:[%s1 + $0x150] sm:$0xff]
    %v104 = vld [vmem:[%s1 + $0x158] sm:$0xff]
    %v105 = vld [vmem:[%s1 + $0x160] sm:$0xff]
    %v106 = vld [vmem:[%s1 + $0x168] sm:$0xff]
    %v107 = vld [vmem:[%s1 + $0x170] sm:$0xff]
    %v108 = vld [vmem:[%s1 + $0x178] sm:$0xff]
    %v109 = vld [vmem:[%s2] sm:$0xff]
    %v111 = vlaneseq
    %v112 = vshrl.u32 %v111, 7
    %v113 = vsub.s32 0, %v112
    %v114 = vrot.slane %v109, %v113
    %v115 = vlaneseq
    %v116 = vshrl.u32 %v115, 7
    %v117 = vsub.s32 1, %v116
    %v118 = vrot.slane %v109, %v117
    %v119 = vlaneseq
    %v120 = vshrl.u32 %v119, 7
    %v121 = vsub.s32 2, %v120
    %v122 = vrot.slane %v109, %v121
    %v123 = vlaneseq
    %v124 = vshrl.u32 %v123, 7
    %v125 = vsub.s32 3, %v124
    %v126 = vrot.slane %v109, %v125
    %v127 = vlaneseq
    %v128 = vshrl.u32 %v127, 7
    %v129 = vsub.s32 4, %v128
    %v130 = vrot.slane %v109, %v129
    %v131 = vlaneseq
    %v132 = vshrl.u32 %v131, 7
    %v133 = vsub.s32 5, %v132
    %v134 = vrot.slane %v109, %v133
    %v135 = vlaneseq
    %v136 = vshrl.u32 %v135, 7
    %v137 = vsub.s32 6, %v136
    %v138 = vrot.slane %v109, %v137
    %v139 = vlaneseq
    %v140 = vshrl.u32 %v139, 7
    %v141 = vsub.s32 7, %v140
    %v142 = vrot.slane %v109, %v141
    %vm151 = vcmask 392192
    %v153 = vsel %vm151, %v60, 0
    %155 = vmatprep.subr.mxu0 0.0
    %156 = vmatpush1.msra.mxu0 0.0
    %157 = vmatprep.subr.mxu0 0.0
    %158 = vmatpush1.msra.mxu0 0.0
    %159 = vmatprep.subr.mxu0 0.0
    %160 = vmatpush1.msra.mxu0 0.0
    %161 = vmatprep.subr.mxu0 0.0
    %162 = vmatpush1.msra.mxu0 0.0
    %163 = vmatprep.subr.mxu0 0.0
    %164 = vmatpush1.msra.mxu0 0.0
    %165 = vmatprep.subr.mxu0 0.0
    %166 = vmatpush1.msra.mxu0 0.0
    %167 = vmatprep.subr.mxu0 0.0
    %168 = vmatpush1.msra.mxu0 0.0
    %169 = vmatprep.subr.mxu0 0.0
    %170 = vmatpush1.msra.mxu0 0.0
    %171 = vmatprep.subr.mxu0 0.0
    %172 = vmatpush1.msra.mxu0 0.0
    %173 = vmatprep.subr.mxu0 0.0
    %174 = vmatpush1.msra.mxu0 0.0
    %175 = vmatprep.subr.mxu0 %v102
    %176 = vmatpush1.msra.mxu0 %v101
    %177 = vmatprep.subr.mxu0 %v94
    %178 = vmatpush1.msra.mxu0 %v93
    %179 = vmatprep.subr.mxu0 %v86
    %180 = vmatpush1.msra.mxu0 %v85
    %181 = vmatprep.subr.mxu0 %v78
    %182 = vmatpush1.msra.mxu0 %v77
    %183 = vmatprep.subr.mxu0 %v70
    %184 = vmatpush1.msra.mxu0 %v69
    %185 = vmatprep.subr.mxu0 %v62
    %186 = vmatpush1.msra.mxu0 %v61
    %187 = vmatprep.subr.mxu0 0.0
    %188 = vmatpush2.msra.mxu0 0.0
    %189 = vmatprep.subr.mxu0 0.0
    %190 = vmatpush2.msra.mxu0 0.0
    %191 = vmatprep.subr.mxu0 0.0
    %192 = vmatpush2.msra.mxu0 0.0
    %193 = vmatprep.subr.mxu0 0.0
    %194 = vmatpush2.msra.mxu0 0.0
    %195 = vmatprep.subr.mxu0 0.0
    %196 = vmatpush2.msra.mxu0 0.0
    %197 = vmatprep.subr.mxu0 0.0
    %198 = vmatpush2.msra.mxu0 0.0
    %199 = vmatprep.subr.mxu0 0.0
    %200 = vmatpush2.msra.mxu0 0.0
    %201 = vmatprep.subr.mxu0 0.0
    %202 = vmatpush2.msra.mxu0 0.0
    %203 = vmatprep.subr.mxu0 0.0
    %204 = vmatpush2.msra.mxu0 0.0
    %205 = vmatprep.subr.mxu0 0.0
    %206 = vmatpush2.msra.mxu0 0.0
    %207 = vmatprep.subr.mxu0 0.0
    %208 = vmatpush2.msra.mxu0 0.0
    %209 = vmatprep.subr.mxu0 0.0
    %210 = vmatpush2.msra.mxu0 0.0
    %211 = vmatprep.subr.mxu0 0.0
    %212 = vmatpush2.msra.mxu0 0.0
    %213 = vmatprep.subr.mxu0 0.0
    %214 = vmatpush2.msra.mxu0 0.0
    %215 = vmatprep.subr.mxu0 0.0
    %216 = vmatpush2.msra.mxu0 0.0
    %217 = vmatprep.subr.mxu0 0.0
    %218 = vmatpush2.msra.mxu0 0.0
    %219 = vmatprep.mubr.f32.mxu0 0.0
    %220 = vmatmul.mubr.f32.gmra.mxu0 %v153
    %v221 = vpop.f32.mrf.mxu0
    %v222 = vadd.f32 %v114, %v221
    %v223 = vpop.f32.mrf.mxu0
    %v224 = vadd.f32 %v118, %v223
    %225 = vdwg.mxu0
    %226 = vmatprep.subr.mxu0 0.0
    %227 = vmatpush1.msra.mxu0 0.0
    %228 = vmatprep.subr.mxu0 0.0
    %229 = vmatpush1.msra.mxu0 0.0
    %230 = vmatprep.subr.mxu0 0.0
    %231 = vmatpush1.msra.mxu0 0.0
    %232 = vmatprep.subr.mxu0 0.0
    %233 = vmatpush1.msra.mxu0 0.0
    %234 = vmatprep.subr.mxu0 0.0
    %235 = vmatpush1.msra.mxu0 0.0
    %236 = vmatprep.subr.mxu0 0.0
    %237 = vmatpush1.msra.mxu0 0.0
    %238 = vmatprep.subr.mxu0 0.0
    %239 = vmatpush1.msra.mxu0 0.0
    %240 = vmatprep.subr.mxu0 0.0
    %241 = vmatpush1.msra.mxu0 0.0
    %242 = vmatprep.subr.mxu0 0.0
    %243 = vmatpush1.msra.mxu0 0.0
    %244 = vmatprep.subr.mxu0 0.0
    %245 = vmatpush1.msra.mxu0 0.0
    %246 = vmatprep.subr.mxu0 %v104
    %247 = vmatpush1.msra.mxu0 %v103
    %248 = vmatprep.subr.mxu0 %v96
    %249 = vmatpush1.msra.mxu0 %v95
    %250 = vmatprep.subr.mxu0 %v88
    %251 = vmatpush1.msra.mxu0 %v87
    %252 = vmatprep.subr.mxu0 %v80
    %253 = vmatpush1.msra.mxu0 %v79
    %254 = vmatprep.subr.mxu0 %v72
    %255 = vmatpush1.msra.mxu0 %v71
    %256 = vmatprep.subr.mxu0 %v64
    %257 = vmatpush1.msra.mxu0 %v63
    %258 = vmatprep.subr.mxu0 0.0
    %259 = vmatpush2.msra.mxu0 0.0
    %260 = vmatprep.subr.mxu0 0.0
    %261 = vmatpush2.msra.mxu0 0.0
    %262 = vmatprep.subr.mxu0 0.0
    %263 = vmatpush2.msra.mxu0 0.0
    %264 = vmatprep.subr.mxu0 0.0
    %265 = vmatpush2.msra.mxu0 0.0
    %266 = vmatprep.subr.mxu0 0.0
    %267 = vmatpush2.msra.mxu0 0.0
    %268 = vmatprep.subr.mxu0 0.0
    %269 = vmatpush2.msra.mxu0 0.0
    %270 = vmatprep.subr.mxu0 0.0
    %271 = vmatpush2.msra.mxu0 0.0
    %272 = vmatprep.subr.mxu0 0.0
    %273 = vmatpush2.msra.mxu0 0.0
    %274 = vmatprep.subr.mxu0 0.0
    %275 = vmatpush2.msra.mxu0 0.0
    %276 = vmatprep.subr.mxu0 0.0
    %277 = vmatpush2.msra.mxu0 0.0
    %278 = vmatprep.subr.mxu0 0.0
    %279 = vmatpush2.msra.mxu0 0.0
    %280 = vmatprep.subr.mxu0 0.0
    %281 = vmatpush2.msra.mxu0 0.0
    %282 = vmatprep.subr.mxu0 0.0
    %283 = vmatpush2.msra.mxu0 0.0
    %284 = vmatprep.subr.mxu0 0.0
    %285 = vmatpush2.msra.mxu0 0.0
    %286 = vmatprep.subr.mxu0 0.0
    %287 = vmatpush2.msra.mxu0 0.0
    %288 = vmatprep.subr.mxu0 0.0
    %289 = vmatpush2.msra.mxu0 0.0
    %290 = vmatprep.mubr.f32.mxu0 0.0
    %291 = vmatmul.mubr.f32.gmra.mxu0 %v153
    %v292 = vpop.f32.mrf.mxu0
    %v293 = vadd.f32 %v122, %v292
    %v294 = vpop.f32.mrf.mxu0
    %v295 = vadd.f32 %v126, %v294
    %296 = vdwg.mxu0
    %297 = vmatprep.subr.mxu0 0.0
    %298 = vmatpush1.msra.mxu0 0.0
    %299 = vmatprep.subr.mxu0 0.0
    %300 = vmatpush1.msra.mxu0 0.0
    %301 = vmatprep.subr.mxu0 0.0
    %302 = vmatpush1.msra.mxu0 0.0
    %303 = vmatprep.subr.mxu0 0.0
    %304 = vmatpush1.msra.mxu0 0.0
    %305 = vmatprep.subr.mxu0 0.0
    %306 = vmatpush1.msra.mxu0 0.0
    %307 = vmatprep.subr.mxu0 0.0
    %308 = vmatpush1.msra.mxu0 0.0
    %309 = vmatprep.subr.mxu0 0.0
    %310 = vmatpush1.msra.mxu0 0.0
    %311 = vmatprep.subr.mxu0 0.0
    %312 = vmatpush1.msra.mxu0 0.0
    %313 = vmatprep.subr.mxu0 0.0
    %314 = vmatpush1.msra.mxu0 0.0
    %315 = vmatprep.subr.mxu0 0.0
    %316 = vmatpush1.msra.mxu0 0.0
    %317 = vmatprep.subr.mxu0 %v106
    %318 = vmatpush1.msra.mxu0 %v105
    %319 = vmatprep.subr.mxu0 %v98
    %320 = vmatpush1.msra.mxu0 %v97
    %321 = vmatprep.subr.mxu0 %v90
    %322 = vmatpush1.msra.mxu0 %v89
    %323 = vmatprep.subr.mxu0 %v82
    %324 = vmatpush1.msra.mxu0 %v81
    %325 = vmatprep.subr.mxu0 %v74
    %326 = vmatpush1.msra.mxu0 %v73
    %327 = vmatprep.subr.mxu0 %v66
    %328 = vmatpush1.msra.mxu0 %v65
    %329 = vmatprep.subr.mxu0 0.0
    %330 = vmatpush2.msra.mxu0 0.0
    %331 = vmatprep.subr.mxu0 0.0
    %332 = vmatpush2.msra.mxu0 0.0
    %333 = vmatprep.subr.mxu0 0.0
    %334 = vmatpush2.msra.mxu0 0.0
    %335 = vmatprep.subr.mxu0 0.0
    %336 = vmatpush2.msra.mxu0 0.0
    %337 = vmatprep.subr.mxu0 0.0
    %338 = vmatpush2.msra.mxu0 0.0
    %339 = vmatprep.subr.mxu0 0.0
    %340 = vmatpush2.msra.mxu0 0.0
    %341 = vmatprep.subr.mxu0 0.0
    %342 = vmatpush2.msra.mxu0 0.0
    %343 = vmatprep.subr.mxu0 0.0
    %344 = vmatpush2.msra.mxu0 0.0
    %345 = vmatprep.subr.mxu0 0.0
    %346 = vmatpush2.msra.mxu0 0.0
    %347 = vmatprep.subr.mxu0 0.0
    %348 = vmatpush2.msra.mxu0 0.0
    %349 = vmatprep.subr.mxu0 0.0
    %350 = vmatpush2.msra.mxu0 0.0
    %351 = vmatprep.subr.mxu0 0.0
    %352 = vmatpush2.msra.mxu0 0.0
    %353 = vmatprep.subr.mxu0 0.0
    %354 = vmatpush2.msra.mxu0 0.0
    %355 = vmatprep.subr.mxu0 0.0
    %356 = vmatpush2.msra.mxu0 0.0
    %357 = vmatprep.subr.mxu0 0.0
    %358 = vmatpush2.msra.mxu0 0.0
    %359 = vmatprep.subr.mxu0 0.0
    %360 = vmatpush2.msra.mxu0 0.0
    %361 = vmatprep.mubr.f32.mxu0 0.0
    %362 = vmatmul.mubr.f32.gmra.mxu0 %v153
    %v363 = vpop.f32.mrf.mxu0
    %v364 = vadd.f32 %v130, %v363
    %v365 = vpop.f32.mrf.mxu0
    %v366 = vadd.f32 %v134, %v365
    %367 = vdwg.mxu0
    %368 = vmatprep.subr.mxu0 0.0
    %369 = vmatpush1.msra.mxu0 0.0
    %370 = vmatprep.subr.mxu0 0.0
    %371 = vmatpush1.msra.mxu0 0.0
    %372 = vmatprep.subr.mxu0 0.0
    %373 = vmatpush1.msra.mxu0 0.0
    %374 = vmatprep.subr.mxu0 0.0
    %375 = vmatpush1.msra.mxu0 0.0
    %376 = vmatprep.subr.mxu0 0.0
    %377 = vmatpush1.msra.mxu0 0.0
    %378 = vmatprep.subr.mxu0 0.0
    %379 = vmatpush1.msra.mxu0 0.0
    %380 = vmatprep.subr.mxu0 0.0
    %381 = vmatpush1.msra.mxu0 0.0
    %382 = vmatprep.subr.mxu0 0.0
    %383 = vmatpush1.msra.mxu0 0.0
    %384 = vmatprep.subr.mxu0 0.0
    %385 = vmatpush1.msra.mxu0 0.0
    %386 = vmatprep.subr.mxu0 0.0
    %387 = vmatpush1.msra.mxu0 0.0
    %388 = vmatprep.subr.mxu0 %v108
    %389 = vmatpush1.msra.mxu0 %v107
    %390 = vmatprep.subr.mxu0 %v100
    %391 = vmatpush1.msra.mxu0 %v99
    %392 = vmatprep.subr.mxu0 %v92
    %393 = vmatpush1.msra.mxu0 %v91
    %394 = vmatprep.subr.mxu0 %v84
    %395 = vmatpush1.msra.mxu0 %v83
    %396 = vmatprep.subr.mxu0 %v76
    %397 = vmatpush1.msra.mxu0 %v75
    %398 = vmatprep.subr.mxu0 %v68
    %399 = vmatpush1.msra.mxu0 %v67
    %400 = vmatprep.subr.mxu0 0.0
    %401 = vmatpush2.msra.mxu0 0.0
    %402 = vmatprep.subr.mxu0 0.0
    %403 = vmatpush2.msra.mxu0 0.0
    %404 = vmatprep.subr.mxu0 0.0
    %405 = vmatpush2.msra.mxu0 0.0
    %406 = vmatprep.subr.mxu0 0.0
    %407 = vmatpush2.msra.mxu0 0.0
    %408 = vmatprep.subr.mxu0 0.0
    %409 = vmatpush2.msra.mxu0 0.0
    %410 = vmatprep.subr.mxu0 0.0
    %411 = vmatpush2.msra.mxu0 0.0
    %412 = vmatprep.subr.mxu0 0.0
    %413 = vmatpush2.msra.mxu0 0.0
    %414 = vmatprep.subr.mxu0 0.0
    %415 = vmatpush2.msra.mxu0 0.0
    %416 = vmatprep.subr.mxu0 0.0
    %417 = vmatpush2.msra.mxu0 0.0
    %418 = vmatprep.subr.mxu0 0.0
    %419 = vmatpush2.msra.mxu0 0.0
    %420 = vmatprep.subr.mxu0 0.0
    %421 = vmatpush2.msra.mxu0 0.0
    %422 = vmatprep.subr.mxu0 0.0
    %423 = vmatpush2.msra.mxu0 0.0
    %424 = vmatprep.subr.mxu0 0.0
    %425 = vmatpush2.msra.mxu0 0.0
    %426 = vmatprep.subr.mxu0 0.0
    %427 = vmatpush2.msra.mxu0 0.0
    %428 = vmatprep.subr.mxu0 0.0
    %429 = vmatpush2.msra.mxu0 0.0
    %430 = vmatprep.subr.mxu0 0.0
    %431 = vmatpush2.msra.mxu0 0.0
    %432 = vmatprep.mubr.f32.mxu0 0.0
    %433 = vmatmul.mubr.f32.gmra.mxu0 %v153
    %v434 = vpop.f32.mrf.mxu0
    %v435 = vadd.f32 %v138, %v434
    %v436 = vpop.f32.mrf.mxu0
    %v437 = vadd.f32 %v142, %v436
    %438 = vdwg.mxu0
    %v439 = vld [vmem:[%s3] sm:$0xff]
    %v440 = vld [vmem:[%s3 + $0x8] sm:$0xff]
    %v441 = vld [vmem:[%s3 + $0x10] sm:$0xff]
    %v442 = vld [vmem:[%s3 + $0x18] sm:$0xff]
    %v443 = vld [vmem:[%s4] sm:$0xff]
    %v444 = vld [vmem:[%s5] sm:$0xff]
    %v445 = vld [vmem:[%s7] sm:$0x1]
    %v447 = vlaneseq
    %v448 = vshrl.u32 %v447, 7
    %v449 = vsub.s32 0, %v448
    %v450 = vrot.slane %v445, %v449
    %vm452 = vcmask 261120
    %v454 = vsel %vm452, %v443, 0
    %456 = vmatprep.subr.mxu0 0.0
    %457 = vmatpush1.msra.mxu0 0.0
    %458 = vmatprep.subr.mxu0 0.0
    %459 = vmatpush1.msra.mxu0 0.0
    %460 = vmatprep.subr.mxu0 0.0
    %461 = vmatpush1.msra.mxu0 0.0
    %462 = vmatprep.subr.mxu0 0.0
    %463 = vmatpush1.msra.mxu0 0.0
    %464 = vmatprep.subr.mxu0 0.0
    %465 = vmatpush1.msra.mxu0 0.0
    %466 = vmatprep.subr.mxu0 0.0
    %467 = vmatpush1.msra.mxu0 0.0
    %468 = vmatprep.subr.mxu0 0.0
    %469 = vmatpush1.msra.mxu0 0.0
    %470 = vmatprep.subr.mxu0 0.0
    %471 = vmatpush1.msra.mxu0 0.0
    %472 = vmatprep.subr.mxu0 0.0
    %473 = vmatpush1.msra.mxu0 0.0
    %474 = vmatprep.subr.mxu0 0.0
    %475 = vmatpush1.msra.mxu0 0.0
    %476 = vmatprep.subr.mxu0 0.0
    %477 = vmatpush1.msra.mxu0 0.0
    %478 = vmatprep.subr.mxu0 0.0
    %479 = vmatpush1.msra.mxu0 0.0
    %480 = vmatprep.subr.mxu0 0.0
    %481 = vmatpush1.msra.mxu0 %v442
    %482 = vmatprep.subr.mxu0 0.0
    %483 = vmatpush1.msra.mxu0 %v441
    %484 = vmatprep.subr.mxu0 0.0
    %485 = vmatpush1.msra.mxu0 %v440
    %486 = vmatprep.subr.mxu0 0.0
    %487 = vmatpush1.msra.mxu0 %v439
    %488 = vmatprep.subr.mxu0 0.0
    %489 = vmatpush2.msra.mxu0 0.0
    %490 = vmatprep.subr.mxu0 0.0
    %491 = vmatpush2.msra.mxu0 0.0
    %492 = vmatprep.subr.mxu0 0.0
    %493 = vmatpush2.msra.mxu0 0.0
    %494 = vmatprep.subr.mxu0 0.0
    %495 = vmatpush2.msra.mxu0 0.0
    %496 = vmatprep.subr.mxu0 0.0
    %497 = vmatpush2.msra.mxu0 0.0
    %498 = vmatprep.subr.mxu0 0.0
    %499 = vmatpush2.msra.mxu0 0.0
    %500 = vmatprep.subr.mxu0 0.0
    %501 = vmatpush2.msra.mxu0 0.0
    %502 = vmatprep.subr.mxu0 0.0
    %503 = vmatpush2.msra.mxu0 0.0
    %504 = vmatprep.subr.mxu0 0.0
    %505 = vmatpush2.msra.mxu0 0.0
    %506 = vmatprep.subr.mxu0 0.0
    %507 = vmatpush2.msra.mxu0 0.0
    %508 = vmatprep.subr.mxu0 0.0
    %509 = vmatpush2.msra.mxu0 0.0
    %510 = vmatprep.subr.mxu0 0.0
    %511 = vmatpush2.msra.mxu0 0.0
    %512 = vmatprep.subr.mxu0 0.0
    %513 = vmatpush2.msra.mxu0 0.0
    %514 = vmatprep.subr.mxu0 0.0
    %515 = vmatpush2.msra.mxu0 0.0
    %516 = vmatprep.subr.mxu0 0.0
    %517 = vmatpush2.msra.mxu0 0.0
    %518 = vmatprep.subr.mxu0 0.0
    %519 = vmatpush2.msra.mxu0 0.0
    %520 = vmatprep.mubr.f32.mxu0 0.0
    %521 = vmatmul.mubr.f32.gmra.mxu0 %v454
    %v522 = vpop.f32.mrf.mxu0
    %v523 = vadd.f32 0.0, %v522
    %v524 = vpop.f32.mrf.mxu0
    %525 = vdwg.mxu0
    %v526 = vadd.f32 %v222, %v523
    %v527 = vxor.u32 %v526, 2147483648
    %v528 = vmul.f32 %v527, 1.442695
    %v529 = vpow.pop %v528
    %v530 = vadd.f32 %v529, 1.0
    %v531 = vrcp.pop %v530
    %v532 = vmul.f32 1.0, %v531
    %v533 = vtanh.pop %v526
    %535 = vrot.lane.b32.xlu0 %v444, 32
    %v536 = vpop.permute.xlu0 %535
    %v538 = vmul.f32 %v532, %v536
    %540 = vrot.lane.b32.xlu0 %v533, 64
    %v541 = vpop.permute.xlu0 %540
    %v543 = vmul.f32 %v532, %v541
    %545 = vrot.lane.b32.xlu0 %v543, 32
    %v546 = vpop.permute.xlu0 %545
    %v548 = vadd.f32 %v538, %v546
    %v549 = vtanh.pop %v548
    %551 = vrot.lane.b32.xlu0 %v549, 64
    %v552 = vpop.permute.xlu0 %551
    %v554 = vmul.f32 %v532, %v552
    %v555 = vld [vmem:[%s6] sm:$0xff]
    %v556 = vld [vmem:[%s6 + $0x8] sm:$0xff]
    %v557 = vld [vmem:[%s6 + $0x10] sm:$0xff]
    %v558 = vld [vmem:[%s6 + $0x18] sm:$0xff]
    %560 = vrot.lane.b32.xlu0 %v554, 32
    %v561 = vpop.permute.xlu0 %560
    %v562 = vsel %vm452, %v561, 0
    %564 = vmatprep.subr.mxu0 0.0
    %565 = vmatpush1.msra.mxu0 0.0
    %566 = vmatprep.subr.mxu0 0.0
    %567 = vmatpush1.msra.mxu0 0.0
    %568 = vmatprep.subr.mxu0 0.0
    %569 = vmatpush1.msra.mxu0 0.0
    %570 = vmatprep.subr.mxu0 0.0
    %571 = vmatpush1.msra.mxu0 0.0
    %572 = vmatprep.subr.mxu0 0.0
    %573 = vmatpush1.msra.mxu0 0.0
    %574 = vmatprep.subr.mxu0 0.0
    %575 = vmatpush1.msra.mxu0 0.0
    %576 = vmatprep.subr.mxu0 0.0
    %577 = vmatpush1.msra.mxu0 0.0
    %578 = vmatprep.subr.mxu0 0.0
    %579 = vmatpush1.msra.mxu0 0.0
    %580 = vmatprep.subr.mxu0 0.0
    %581 = vmatpush1.msra.mxu0 0.0
    %582 = vmatprep.subr.mxu0 0.0
    %583 = vmatpush1.msra.mxu0 0.0
    %584 = vmatprep.subr.mxu0 0.0
    %585 = vmatpush1.msra.mxu0 0.0
    %586 = vmatprep.subr.mxu0 0.0
    %587 = vmatpush1.msra.mxu0 0.0
    %588 = vmatprep.subr.mxu0 0.0
    %589 = vmatpush1.msra.mxu0 %v558
    %590 = vmatprep.subr.mxu0 0.0
    %591 = vmatpush1.msra.mxu0 %v557
    %592 = vmatprep.subr.mxu0 0.0
    %593 = vmatpush1.msra.mxu0 %v556
    %594 = vmatprep.subr.mxu0 0.0
    %595 = vmatpush1.msra.mxu0 %v555
    %596 = vmatprep.subr.mxu0 0.0
    %597 = vmatpush2.msra.mxu0 0.0
    %598 = vmatprep.subr.mxu0 0.0
    %599 = vmatpush2.msra.mxu0 0.0
    %600 = vmatprep.subr.mxu0 0.0
    %601 = vmatpush2.msra.mxu0 0.0
    %602 = vmatprep.subr.mxu0 0.0
    %603 = vmatpush2.msra.mxu0 0.0
    %604 = vmatprep.subr.mxu0 0.0
    %605 = vmatpush2.msra.mxu0 0.0
    %606 = vmatprep.subr.mxu0 0.0
    %607 = vmatpush2.msra.mxu0 0.0
    %608 = vmatprep.subr.mxu0 0.0
    %609 = vmatpush2.msra.mxu0 0.0
    %610 = vmatprep.subr.mxu0 0.0
    %611 = vmatpush2.msra.mxu0 0.0
    %612 = vmatprep.subr.mxu0 0.0
    %613 = vmatpush2.msra.mxu0 0.0
    %614 = vmatprep.subr.mxu0 0.0
    %615 = vmatpush2.msra.mxu0 0.0
    %616 = vmatprep.subr.mxu0 0.0
    %617 = vmatpush2.msra.mxu0 0.0
    %618 = vmatprep.subr.mxu0 0.0
    %619 = vmatpush2.msra.mxu0 0.0
    %620 = vmatprep.subr.mxu0 0.0
    %621 = vmatpush2.msra.mxu0 0.0
    %622 = vmatprep.subr.mxu0 0.0
    %623 = vmatpush2.msra.mxu0 0.0
    %624 = vmatprep.subr.mxu0 0.0
    %625 = vmatpush2.msra.mxu0 0.0
    %626 = vmatprep.subr.mxu0 0.0
    %627 = vmatpush2.msra.mxu0 0.0
    %628 = vmatprep.mubr.f32.mxu0 0.0
    %629 = vmatmul.mubr.f32.gmra.mxu0 %v562
    %v630 = vpop.f32.mrf.mxu0
    %v631 = vadd.f32 0.0, %v630
    %v632 = vpop.f32.mrf.mxu0
    %633 = vdwg.mxu0
    %v634 = vadd.f32 %v450, %v631
    %635 = vmatprep.subr.mxu0 0.0
    %636 = vmatpush1.msra.mxu0 0.0
    %637 = vmatprep.subr.mxu0 0.0
    %638 = vmatpush1.msra.mxu0 0.0
    %639 = vmatprep.subr.mxu0 0.0
    %640 = vmatpush1.msra.mxu0 0.0
    %641 = vmatprep.subr.mxu0 0.0
    %642 = vmatpush1.msra.mxu0 0.0
    %643 = vmatprep.subr.mxu0 0.0
    %644 = vmatpush1.msra.mxu0 0.0
    %645 = vmatprep.subr.mxu0 0.0
    %646 = vmatpush1.msra.mxu0 0.0
    %647 = vmatprep.subr.mxu0 0.0
    %648 = vmatpush1.msra.mxu0 0.0
    %649 = vmatprep.subr.mxu0 0.0
    %650 = vmatpush1.msra.mxu0 0.0
    %651 = vmatprep.subr.mxu0 0.0
    %652 = vmatpush1.msra.mxu0 0.0
    %653 = vmatprep.subr.mxu0 0.0
    %654 = vmatpush1.msra.mxu0 0.0
    %655 = vmatprep.subr.mxu0 0.0
    %656 = vmatpush1.msra.mxu0 0.0
    %657 = vmatprep.subr.mxu0 0.0
    %658 = vmatpush1.msra.mxu0 0.0
    %659 = vmatprep.subr.mxu0 0.0
    %660 = vmatpush1.msra.mxu0 %v442
    %661 = vmatprep.subr.mxu0 0.0
    %662 = vmatpush1.msra.mxu0 %v441
    %663 = vmatprep.subr.mxu0 0.0
    %664 = vmatpush1.msra.mxu0 %v440
    %665 = vmatprep.subr.mxu0 0.0
    %666 = vmatpush1.msra.mxu0 %v439
    %667 = vmatprep.subr.mxu0 0.0
    %668 = vmatpush2.msra.mxu0 0.0
    %669 = vmatprep.subr.mxu0 0.0
    %670 = vmatpush2.msra.mxu0 0.0
    %671 = vmatprep.subr.mxu0 0.0
    %672 = vmatpush2.msra.mxu0 0.0
    %673 = vmatprep.subr.mxu0 0.0
    %674 = vmatpush2.msra.mxu0 0.0
    %675 = vmatprep.subr.mxu0 0.0
    %676 = vmatpush2.msra.mxu0 0.0
    %677 = vmatprep.subr.mxu0 0.0
    %678 = vmatpush2.msra.mxu0 0.0
    %679 = vmatprep.subr.mxu0 0.0
    %680 = vmatpush2.msra.mxu0 0.0
    %681 = vmatprep.subr.mxu0 0.0
    %682 = vmatpush2.msra.mxu0 0.0
    %683 = vmatprep.subr.mxu0 0.0
    %684 = vmatpush2.msra.mxu0 0.0
    %685 = vmatprep.subr.mxu0 0.0
    %686 = vmatpush2.msra.mxu0 0.0
    %687 = vmatprep.subr.mxu0 0.0
    %688 = vmatpush2.msra.mxu0 0.0
    %689 = vmatprep.subr.mxu0 0.0
    %690 = vmatpush2.msra.mxu0 0.0
    %691 = vmatprep.subr.mxu0 0.0
    %692 = vmatpush2.msra.mxu0 0.0
    %693 = vmatprep.subr.mxu0 0.0
    %694 = vmatpush2.msra.mxu0 0.0
    %695 = vmatprep.subr.mxu0 0.0
    %696 = vmatpush2.msra.mxu0 0.0
    %697 = vmatprep.subr.mxu0 0.0
    %698 = vmatpush2.msra.mxu0 0.0
    %699 = vmatprep.mubr.f32.mxu0 0.0
    %700 = vmatmul.mubr.f32.gmra.mxu0 %v562
    %v701 = vpop.f32.mrf.mxu0
    %v702 = vadd.f32 0.0, %v701
    %v703 = vpop.f32.mrf.mxu0
    %704 = vdwg.mxu0
    %v705 = vadd.f32 %v224, %v702
    %v706 = vxor.u32 %v705, 2147483648
    %v707 = vmul.f32 %v706, 1.442695
    %v708 = vpow.pop %v707
    %v709 = vadd.f32 %v708, 1.0
    %v710 = vrcp.pop %v709
    %v711 = vmul.f32 1.0, %v710
    %v712 = vtanh.pop %v705
    %v713 = vmul.f32 %v711, %v548
    %715 = vrot.lane.b32.xlu0 %v712, 64
    %v716 = vpop.permute.xlu0 %715
    %v718 = vmul.f32 %v711, %v716
    %720 = vrot.lane.b32.xlu0 %v718, 32
    %v721 = vpop.permute.xlu0 %720
    %v723 = vadd.f32 %v713, %v721
    %v724 = vtanh.pop %v723
    %726 = vrot.lane.b32.xlu0 %v724, 64
    %v727 = vpop.permute.xlu0 %726
    %v729 = vmul.f32 %v711, %v727
    %v730 = vld [vmem:[%s6 + $0x20] sm:$0xff]
    %v731 = vld [vmem:[%s6 + $0x28] sm:$0xff]
    %v732 = vld [vmem:[%s6 + $0x30] sm:$0xff]
    %v733 = vld [vmem:[%s6 + $0x38] sm:$0xff]
    %735 = vrot.lane.b32.xlu0 %v729, 32
    %v736 = vpop.permute.xlu0 %735
    %v737 = vsel %vm452, %v736, 0
    %739 = vmatprep.subr.mxu0 0.0
    %740 = vmatpush1.msra.mxu0 0.0
    %741 = vmatprep.subr.mxu0 0.0
    %742 = vmatpush1.msra.mxu0 0.0
    %743 = vmatprep.subr.mxu0 0.0
    %744 = vmatpush1.msra.mxu0 0.0
    %745 = vmatprep.subr.mxu0 0.0
    %746 = vmatpush1.msra.mxu0 0.0
    %747 = vmatprep.subr.mxu0 0.0
    %748 = vmatpush1.msra.mxu0 0.0
    %749 = vmatprep.subr.mxu0 0.0
    %750 = vmatpush1.msra.mxu0 0.0
    %751 = vmatprep.subr.mxu0 0.0
    %752 = vmatpush1.msra.mxu0 0.0
    %753 = vmatprep.subr.mxu0 0.0
    %754 = vmatpush1.msra.mxu0 0.0
    %755 = vmatprep.subr.mxu0 0.0
    %756 = vmatpush1.msra.mxu0 0.0
    %757 = vmatprep.subr.mxu0 0.0
    %758 = vmatpush1.msra.mxu0 0.0
    %759 = vmatprep.subr.mxu0 0.0
    %760 = vmatpush1.msra.mxu0 0.0
    %761 = vmatprep.subr.mxu0 0.0
    %762 = vmatpush1.msra.mxu0 0.0
    %763 = vmatprep.subr.mxu0 0.0
    %764 = vmatpush1.msra.mxu0 %v733
    %765 = vmatprep.subr.mxu0 0.0
    %766 = vmatpush1.msra.mxu0 %v732
    %767 = vmatprep.subr.mxu0 0.0
    %768 = vmatpush1.msra.mxu0 %v731
    %769 = vmatprep.subr.mxu0 0.0
    %770 = vmatpush1.msra.mxu0 %v730
    %771 = vmatprep.subr.mxu0 0.0
    %772 = vmatpush2.msra.mxu0 0.0
    %773 = vmatprep.subr.mxu0 0.0
    %774 = vmatpush2.msra.mxu0 0.0
    %775 = vmatprep.subr.mxu0 0.0
    %776 = vmatpush2.msra.mxu0 0.0
    %777 = vmatprep.subr.mxu0 0.0
    %778 = vmatpush2.msra.mxu0 0.0
    %779 = vmatprep.subr.mxu0 0.0
    %780 = vmatpush2.msra.mxu0 0.0
    %781 = vmatprep.subr.mxu0 0.0
    %782 = vmatpush2.msra.mxu0 0.0
    %783 = vmatprep.subr.mxu0 0.0
    %784 = vmatpush2.msra.mxu0 0.0
    %785 = vmatprep.subr.mxu0 0.0
    %786 = vmatpush2.msra.mxu0 0.0
    %787 = vmatprep.subr.mxu0 0.0
    %788 = vmatpush2.msra.mxu0 0.0
    %789 = vmatprep.subr.mxu0 0.0
    %790 = vmatpush2.msra.mxu0 0.0
    %791 = vmatprep.subr.mxu0 0.0
    %792 = vmatpush2.msra.mxu0 0.0
    %793 = vmatprep.subr.mxu0 0.0
    %794 = vmatpush2.msra.mxu0 0.0
    %795 = vmatprep.subr.mxu0 0.0
    %796 = vmatpush2.msra.mxu0 0.0
    %797 = vmatprep.subr.mxu0 0.0
    %798 = vmatpush2.msra.mxu0 0.0
    %799 = vmatprep.subr.mxu0 0.0
    %800 = vmatpush2.msra.mxu0 0.0
    %801 = vmatprep.subr.mxu0 0.0
    %802 = vmatpush2.msra.mxu0 0.0
    %803 = vmatprep.mubr.f32.mxu0 0.0
    %804 = vmatmul.mubr.f32.gmra.mxu0 %v737
    %v805 = vpop.f32.mrf.mxu0
    %v806 = vadd.f32 0.0, %v805
    %v807 = vpop.f32.mrf.mxu0
    %808 = vdwg.mxu0
    %v809 = vadd.f32 %v634, %v806
    %810 = vmatprep.subr.mxu0 0.0
    %811 = vmatpush1.msra.mxu0 0.0
    %812 = vmatprep.subr.mxu0 0.0
    %813 = vmatpush1.msra.mxu0 0.0
    %814 = vmatprep.subr.mxu0 0.0
    %815 = vmatpush1.msra.mxu0 0.0
    %816 = vmatprep.subr.mxu0 0.0
    %817 = vmatpush1.msra.mxu0 0.0
    %818 = vmatprep.subr.mxu0 0.0
    %819 = vmatpush1.msra.mxu0 0.0
    %820 = vmatprep.subr.mxu0 0.0
    %821 = vmatpush1.msra.mxu0 0.0
    %822 = vmatprep.subr.mxu0 0.0
    %823 = vmatpush1.msra.mxu0 0.0
    %824 = vmatprep.subr.mxu0 0.0
    %825 = vmatpush1.msra.mxu0 0.0
    %826 = vmatprep.subr.mxu0 0.0
    %827 = vmatpush1.msra.mxu0 0.0
    %828 = vmatprep.subr.mxu0 0.0
    %829 = vmatpush1.msra.mxu0 0.0
    %830 = vmatprep.subr.mxu0 0.0
    %831 = vmatpush1.msra.mxu0 0.0
    %832 = vmatprep.subr.mxu0 0.0
    %833 = vmatpush1.msra.mxu0 0.0
    %834 = vmatprep.subr.mxu0 0.0
    %835 = vmatpush1.msra.mxu0 %v442
    %836 = vmatprep.subr.mxu0 0.0
    %837 = vmatpush1.msra.mxu0 %v441
    %838 = vmatprep.subr.mxu0 0.0
    %839 = vmatpush1.msra.mxu0 %v440
    %840 = vmatprep.subr.mxu0 0.0
    %841 = vmatpush1.msra.mxu0 %v439
    %842 = vmatprep.subr.mxu0 0.0
    %843 = vmatpush2.msra.mxu0 0.0
    %844 = vmatprep.subr.mxu0 0.0
    %845 = vmatpush2.msra.mxu0 0.0
    %846 = vmatprep.subr.mxu0 0.0
    %847 = vmatpush2.msra.mxu0 0.0
    %848 = vmatprep.subr.mxu0 0.0
    %849 = vmatpush2.msra.mxu0 0.0
    %850 = vmatprep.subr.mxu0 0.0
    %851 = vmatpush2.msra.mxu0 0.0
    %852 = vmatprep.subr.mxu0 0.0
    %853 = vmatpush2.msra.mxu0 0.0
    %854 = vmatprep.subr.mxu0 0.0
    %855 = vmatpush2.msra.mxu0 0.0
    %856 = vmatprep.subr.mxu0 0.0
    %857 = vmatpush2.msra.mxu0 0.0
    %858 = vmatprep.subr.mxu0 0.0
    %859 = vmatpush2.msra.mxu0 0.0
    %860 = vmatprep.subr.mxu0 0.0
    %861 = vmatpush2.msra.mxu0 0.0
    %862 = vmatprep.subr.mxu0 0.0
    %863 = vmatpush2.msra.mxu0 0.0
    %864 = vmatprep.subr.mxu0 0.0
    %865 = vmatpush2.msra.mxu0 0.0
    %866 = vmatprep.subr.mxu0 0.0
    %867 = vmatpush2.msra.mxu0 0.0
    %868 = vmatprep.subr.mxu0 0.0
    %869 = vmatpush2.msra.mxu0 0.0
    %870 = vmatprep.subr.mxu0 0.0
    %871 = vmatpush2.msra.mxu0 0.0
    %872 = vmatprep.subr.mxu0 0.0
    %873 = vmatpush2.msra.mxu0 0.0
    %874 = vmatprep.mubr.f32.mxu0 0.0
    %875 = vmatmul.mubr.f32.gmra.mxu0 %v737
    %v876 = vpop.f32.mrf.mxu0
    %v877 = vadd.f32 0.0, %v876
    %v878 = vpop.f32.mrf.mxu0
    %879 = vdwg.mxu0
    %v880 = vadd.f32 %v293, %v877
    %v881 = vxor.u32 %v880, 2147483648
    %v882 = vmul.f32 %v881, 1.442695
    %v883 = vpow.pop %v882
    %v884 = vadd.f32 %v883, 1.0
    %v885 = vrcp.pop %v884
    %v886 = vmul.f32 1.0, %v885
    %v887 = vtanh.pop %v880
    %v888 = vmul.f32 %v886, %v723
    %890 = vrot.lane.b32.xlu0 %v887, 64
    %v891 = vpop.permute.xlu0 %890
    %v893 = vmul.f32 %v886, %v891
    %895 = vrot.lane.b32.xlu0 %v893, 32
    %v896 = vpop.permute.xlu0 %895
    %v898 = vadd.f32 %v888, %v896
    %v899 = vtanh.pop %v898
    %901 = vrot.lane.b32.xlu0 %v899, 64
    %v902 = vpop.permute.xlu0 %901
    %v904 = vmul.f32 %v886, %v902
    %v905 = vld [vmem:[%s6 + $0x40] sm:$0xff]
    %v906 = vld [vmem:[%s6 + $0x48] sm:$0xff]
    %v907 = vld [vmem:[%s6 + $0x50] sm:$0xff]
    %v908 = vld [vmem:[%s6 + $0x58] sm:$0xff]
    %910 = vrot.lane.b32.xlu0 %v904, 32
    %v911 = vpop.permute.xlu0 %910
    %v912 = vsel %vm452, %v911, 0
    %914 = vmatprep.subr.mxu0 0.0
    %915 = vmatpush1.msra.mxu0 0.0
    %916 = vmatprep.subr.mxu0 0.0
    %917 = vmatpush1.msra.mxu0 0.0
    %918 = vmatprep.subr.mxu0 0.0
    %919 = vmatpush1.msra.mxu0 0.0
    %920 = vmatprep.subr.mxu0 0.0
    %921 = vmatpush1.msra.mxu0 0.0
    %922 = vmatprep.subr.mxu0 0.0
    %923 = vmatpush1.msra.mxu0 0.0
    %924 = vmatprep.subr.mxu0 0.0
    %925 = vmatpush1.msra.mxu0 0.0
    %926 = vmatprep.subr.mxu0 0.0
    %927 = vmatpush1.msra.mxu0 0.0
    %928 = vmatprep.subr.mxu0 0.0
    %929 = vmatpush1.msra.mxu0 0.0
    %930 = vmatprep.subr.mxu0 0.0
    %931 = vmatpush1.msra.mxu0 0.0
    %932 = vmatprep.subr.mxu0 0.0
    %933 = vmatpush1.msra.mxu0 0.0
    %934 = vmatprep.subr.mxu0 0.0
    %935 = vmatpush1.msra.mxu0 0.0
    %936 = vmatprep.subr.mxu0 0.0
    %937 = vmatpush1.msra.mxu0 0.0
    %938 = vmatprep.subr.mxu0 0.0
    %939 = vmatpush1.msra.mxu0 %v908
    %940 = vmatprep.subr.mxu0 0.0
    %941 = vmatpush1.msra.mxu0 %v907
    %942 = vmatprep.subr.mxu0 0.0
    %943 = vmatpush1.msra.mxu0 %v906
    %944 = vmatprep.subr.mxu0 0.0
    %945 = vmatpush1.msra.mxu0 %v905
    %946 = vmatprep.subr.mxu0 0.0
    %947 = vmatpush2.msra.mxu0 0.0
    %948 = vmatprep.subr.mxu0 0.0
    %949 = vmatpush2.msra.mxu0 0.0
    %950 = vmatprep.subr.mxu0 0.0
    %951 = vmatpush2.msra.mxu0 0.0
    %952 = vmatprep.subr.mxu0 0.0
    %953 = vmatpush2.msra.mxu0 0.0
    %954 = vmatprep.subr.mxu0 0.0
    %955 = vmatpush2.msra.mxu0 0.0
    %956 = vmatprep.subr.mxu0 0.0
    %957 = vmatpush2.msra.mxu0 0.0
    %958 = vmatprep.subr.mxu0 0.0
    %959 = vmatpush2.msra.mxu0 0.0
    %960 = vmatprep.subr.mxu0 0.0
    %961 = vmatpush2.msra.mxu0 0.0
    %962 = vmatprep.subr.mxu0 0.0
    %963 = vmatpush2.msra.mxu0 0.0
    %964 = vmatprep.subr.mxu0 0.0
    %965 = vmatpush2.msra.mxu0 0.0
    %966 = vmatprep.subr.mxu0 0.0
    %967 = vmatpush2.msra.mxu0 0.0
    %968 = vmatprep.subr.mxu0 0.0
    %969 = vmatpush2.msra.mxu0 0.0
    %970 = vmatprep.subr.mxu0 0.0
    %971 = vmatpush2.msra.mxu0 0.0
    %972 = vmatprep.subr.mxu0 0.0
    %973 = vmatpush2.msra.mxu0 0.0
    %974 = vmatprep.subr.mxu0 0.0
    %975 = vmatpush2.msra.mxu0 0.0
    %976 = vmatprep.subr.mxu0 0.0
    %977 = vmatpush2.msra.mxu0 0.0
    %978 = vmatprep.mubr.f32.mxu0 0.0
    %979 = vmatmul.mubr.f32.gmra.mxu0 %v912
    %v980 = vpop.f32.mrf.mxu0
    %v981 = vadd.f32 0.0, %v980
    %v982 = vpop.f32.mrf.mxu0
    %983 = vdwg.mxu0
    %v984 = vadd.f32 %v809, %v981
    %985 = vmatprep.subr.mxu0 0.0
    %986 = vmatpush1.msra.mxu0 0.0
    %987 = vmatprep.subr.mxu0 0.0
    %988 = vmatpush1.msra.mxu0 0.0
    %989 = vmatprep.subr.mxu0 0.0
    %990 = vmatpush1.msra.mxu0 0.0
    %991 = vmatprep.subr.mxu0 0.0
    %992 = vmatpush1.msra.mxu0 0.0
    %993 = vmatprep.subr.mxu0 0.0
    %994 = vmatpush1.msra.mxu0 0.0
    %995 = vmatprep.subr.mxu0 0.0
    %996 = vmatpush1.msra.mxu0 0.0
    %997 = vmatprep.subr.mxu0 0.0
    %998 = vmatpush1.msra.mxu0 0.0
    %999 = vmatprep.subr.mxu0 0.0
    %1000 = vmatpush1.msra.mxu0 0.0
    %1001 = vmatprep.subr.mxu0 0.0
    %1002 = vmatpush1.msra.mxu0 0.0
    %1003 = vmatprep.subr.mxu0 0.0
    %1004 = vmatpush1.msra.mxu0 0.0
    %1005 = vmatprep.subr.mxu0 0.0
    %1006 = vmatpush1.msra.mxu0 0.0
    %1007 = vmatprep.subr.mxu0 0.0
    %1008 = vmatpush1.msra.mxu0 0.0
    %1009 = vmatprep.subr.mxu0 0.0
    %1010 = vmatpush1.msra.mxu0 %v442
    %1011 = vmatprep.subr.mxu0 0.0
    %1012 = vmatpush1.msra.mxu0 %v441
    %1013 = vmatprep.subr.mxu0 0.0
    %1014 = vmatpush1.msra.mxu0 %v440
    %1015 = vmatprep.subr.mxu0 0.0
    %1016 = vmatpush1.msra.mxu0 %v439
    %1017 = vmatprep.subr.mxu0 0.0
    %1018 = vmatpush2.msra.mxu0 0.0
    %1019 = vmatprep.subr.mxu0 0.0
    %1020 = vmatpush2.msra.mxu0 0.0
    %1021 = vmatprep.subr.mxu0 0.0
    %1022 = vmatpush2.msra.mxu0 0.0
    %1023 = vmatprep.subr.mxu0 0.0
    %1024 = vmatpush2.msra.mxu0 0.0
    %1025 = vmatprep.subr.mxu0 0.0
    %1026 = vmatpush2.msra.mxu0 0.0
    %1027 = vmatprep.subr.mxu0 0.0
    %1028 = vmatpush2.msra.mxu0 0.0
    %1029 = vmatprep.subr.mxu0 0.0
    %1030 = vmatpush2.msra.mxu0 0.0
    %1031 = vmatprep.subr.mxu0 0.0
    %1032 = vmatpush2.msra.mxu0 0.0
    %1033 = vmatprep.subr.mxu0 0.0
    %1034 = vmatpush2.msra.mxu0 0.0
    %1035 = vmatprep.subr.mxu0 0.0
    %1036 = vmatpush2.msra.mxu0 0.0
    %1037 = vmatprep.subr.mxu0 0.0
    %1038 = vmatpush2.msra.mxu0 0.0
    %1039 = vmatprep.subr.mxu0 0.0
    %1040 = vmatpush2.msra.mxu0 0.0
    %1041 = vmatprep.subr.mxu0 0.0
    %1042 = vmatpush2.msra.mxu0 0.0
    %1043 = vmatprep.subr.mxu0 0.0
    %1044 = vmatpush2.msra.mxu0 0.0
    %1045 = vmatprep.subr.mxu0 0.0
    %1046 = vmatpush2.msra.mxu0 0.0
    %1047 = vmatprep.subr.mxu0 0.0
    %1048 = vmatpush2.msra.mxu0 0.0
    %1049 = vmatprep.mubr.f32.mxu0 0.0
    %1050 = vmatmul.mubr.f32.gmra.mxu0 %v912
    %v1051 = vpop.f32.mrf.mxu0
    %v1052 = vadd.f32 0.0, %v1051
    %v1053 = vpop.f32.mrf.mxu0
    %1054 = vdwg.mxu0
    %v1055 = vadd.f32 %v295, %v1052
    %v1056 = vxor.u32 %v1055, 2147483648
    %v1057 = vmul.f32 %v1056, 1.442695
    %v1058 = vpow.pop %v1057
    %v1059 = vadd.f32 %v1058, 1.0
    %v1060 = vrcp.pop %v1059
    %v1061 = vmul.f32 1.0, %v1060
    %v1062 = vtanh.pop %v1055
    %v1063 = vmul.f32 %v1061, %v898
    %1065 = vrot.lane.b32.xlu0 %v1062, 64
    %v1066 = vpop.permute.xlu0 %1065
    %v1068 = vmul.f32 %v1061, %v1066
    %1070 = vrot.lane.b32.xlu0 %v1068, 32
    %v1071 = vpop.permute.xlu0 %1070
    %v1073 = vadd.f32 %v1063, %v1071
    %v1074 = vtanh.pop %v1073
    %1076 = vrot.lane.b32.xlu0 %v1074, 64
    %v1077 = vpop.permute.xlu0 %1076
    %v1079 = vmul.f32 %v1061, %v1077
    %v1080 = vld [vmem:[%s6 + $0x60] sm:$0xff]
    %v1081 = vld [vmem:[%s6 + $0x68] sm:$0xff]
    %v1082 = vld [vmem:[%s6 + $0x70] sm:$0xff]
    %v1083 = vld [vmem:[%s6 + $0x78] sm:$0xff]
    %1085 = vrot.lane.b32.xlu0 %v1079, 32
    %v1086 = vpop.permute.xlu0 %1085
    %v1087 = vsel %vm452, %v1086, 0
    %1089 = vmatprep.subr.mxu0 0.0
    %1090 = vmatpush1.msra.mxu0 0.0
    %1091 = vmatprep.subr.mxu0 0.0
    %1092 = vmatpush1.msra.mxu0 0.0
    %1093 = vmatprep.subr.mxu0 0.0
    %1094 = vmatpush1.msra.mxu0 0.0
    %1095 = vmatprep.subr.mxu0 0.0
    %1096 = vmatpush1.msra.mxu0 0.0
    %1097 = vmatprep.subr.mxu0 0.0
    %1098 = vmatpush1.msra.mxu0 0.0
    %1099 = vmatprep.subr.mxu0 0.0
    %1100 = vmatpush1.msra.mxu0 0.0
    %1101 = vmatprep.subr.mxu0 0.0
    %1102 = vmatpush1.msra.mxu0 0.0
    %1103 = vmatprep.subr.mxu0 0.0
    %1104 = vmatpush1.msra.mxu0 0.0
    %1105 = vmatprep.subr.mxu0 0.0
    %1106 = vmatpush1.msra.mxu0 0.0
    %1107 = vmatprep.subr.mxu0 0.0
    %1108 = vmatpush1.msra.mxu0 0.0
    %1109 = vmatprep.subr.mxu0 0.0
    %1110 = vmatpush1.msra.mxu0 0.0
    %1111 = vmatprep.subr.mxu0 0.0
    %1112 = vmatpush1.msra.mxu0 0.0
    %1113 = vmatprep.subr.mxu0 0.0
    %1114 = vmatpush1.msra.mxu0 %v1083
    %1115 = vmatprep.subr.mxu0 0.0
    %1116 = vmatpush1.msra.mxu0 %v1082
    %1117 = vmatprep.subr.mxu0 0.0
    %1118 = vmatpush1.msra.mxu0 %v1081
    %1119 = vmatprep.subr.mxu0 0.0
    %1120 = vmatpush1.msra.mxu0 %v1080
    %1121 = vmatprep.subr.mxu0 0.0
    %1122 = vmatpush2.msra.mxu0 0.0
    %1123 = vmatprep.subr.mxu0 0.0
    %1124 = vmatpush2.msra.mxu0 0.0
    %1125 = vmatprep.subr.mxu0 0.0
    %1126 = vmatpush2.msra.mxu0 0.0
    %1127 = vmatprep.subr.mxu0 0.0
    %1128 = vmatpush2.msra.mxu0 0.0
    %1129 = vmatprep.subr.mxu0 0.0
    %1130 = vmatpush2.msra.mxu0 0.0
    %1131 = vmatprep.subr.mxu0 0.0
    %1132 = vmatpush2.msra.mxu0 0.0
    %1133 = vmatprep.subr.mxu0 0.0
    %1134 = vmatpush2.msra.mxu0 0.0
    %1135 = vmatprep.subr.mxu0 0.0
    %1136 = vmatpush2.msra.mxu0 0.0
    %1137 = vmatprep.subr.mxu0 0.0
    %1138 = vmatpush2.msra.mxu0 0.0
    %1139 = vmatprep.subr.mxu0 0.0
    %1140 = vmatpush2.msra.mxu0 0.0
    %1141 = vmatprep.subr.mxu0 0.0
    %1142 = vmatpush2.msra.mxu0 0.0
    %1143 = vmatprep.subr.mxu0 0.0
    %1144 = vmatpush2.msra.mxu0 0.0
    %1145 = vmatprep.subr.mxu0 0.0
    %1146 = vmatpush2.msra.mxu0 0.0
    %1147 = vmatprep.subr.mxu0 0.0
    %1148 = vmatpush2.msra.mxu0 0.0
    %1149 = vmatprep.subr.mxu0 0.0
    %1150 = vmatpush2.msra.mxu0 0.0
    %1151 = vmatprep.subr.mxu0 0.0
    %1152 = vmatpush2.msra.mxu0 0.0
    %1153 = vmatprep.mubr.f32.mxu0 0.0
    %1154 = vmatmul.mubr.f32.gmra.mxu0 %v1087
    %v1155 = vpop.f32.mrf.mxu0
    %v1156 = vadd.f32 0.0, %v1155
    %v1157 = vpop.f32.mrf.mxu0
    %1158 = vdwg.mxu0
    %v1159 = vadd.f32 %v984, %v1156
    %1160 = vmatprep.subr.mxu0 0.0
    %1161 = vmatpush1.msra.mxu0 0.0
    %1162 = vmatprep.subr.mxu0 0.0
    %1163 = vmatpush1.msra.mxu0 0.0
    %1164 = vmatprep.subr.mxu0 0.0
    %1165 = vmatpush1.msra.mxu0 0.0
    %1166 = vmatprep.subr.mxu0 0.0
    %1167 = vmatpush1.msra.mxu0 0.0
    %1168 = vmatprep.subr.mxu0 0.0
    %1169 = vmatpush1.msra.mxu0 0.0
    %1170 = vmatprep.subr.mxu0 0.0
    %1171 = vmatpush1.msra.mxu0 0.0
    %1172 = vmatprep.subr.mxu0 0.0
    %1173 = vmatpush1.msra.mxu0 0.0
    %1174 = vmatprep.subr.mxu0 0.0
    %1175 = vmatpush1.msra.mxu0 0.0
    %1176 = vmatprep.subr.mxu0 0.0
    %1177 = vmatpush1.msra.mxu0 0.0
    %1178 = vmatprep.subr.mxu0 0.0
    %1179 = vmatpush1.msra.mxu0 0.0
    %1180 = vmatprep.subr.mxu0 0.0
    %1181 = vmatpush1.msra.mxu0 0.0
    %1182 = vmatprep.subr.mxu0 0.0
    %1183 = vmatpush1.msra.mxu0 0.0
    %1184 = vmatprep.subr.mxu0 0.0
    %1185 = vmatpush1.msra.mxu0 %v442
    %1186 = vmatprep.subr.mxu0 0.0
    %1187 = vmatpush1.msra.mxu0 %v441
    %1188 = vmatprep.subr.mxu0 0.0
    %1189 = vmatpush1.msra.mxu0 %v440
    %1190 = vmatprep.subr.mxu0 0.0
    %1191 = vmatpush1.msra.mxu0 %v439
    %1192 = vmatprep.subr.mxu0 0.0
    %1193 = vmatpush2.msra.mxu0 0.0
    %1194 = vmatprep.subr.mxu0 0.0
    %1195 = vmatpush2.msra.mxu0 0.0
    %1196 = vmatprep.subr.mxu0 0.0
    %1197 = vmatpush2.msra.mxu0 0.0
    %1198 = vmatprep.subr.mxu0 0.0
    %1199 = vmatpush2.msra.mxu0 0.0
    %1200 = vmatprep.subr.mxu0 0.0
    %1201 = vmatpush2.msra.mxu0 0.0
    %1202 = vmatprep.subr.mxu0 0.0
    %1203 = vmatpush2.msra.mxu0 0.0
    %1204 = vmatprep.subr.mxu0 0.0
    %1205 = vmatpush2.msra.mxu0 0.0
    %1206 = vmatprep.subr.mxu0 0.0
    %1207 = vmatpush2.msra.mxu0 0.0
    %1208 = vmatprep.subr.mxu0 0.0
    %1209 = vmatpush2.msra.mxu0 0.0
    %1210 = vmatprep.subr.mxu0 0.0
    %1211 = vmatpush2.msra.mxu0 0.0
    %1212 = vmatprep.subr.mxu0 0.0
    %1213 = vmatpush2.msra.mxu0 0.0
    %1214 = vmatprep.subr.mxu0 0.0
    %1215 = vmatpush2.msra.mxu0 0.0
    %1216 = vmatprep.subr.mxu0 0.0
    %1217 = vmatpush2.msra.mxu0 0.0
    %1218 = vmatprep.subr.mxu0 0.0
    %1219 = vmatpush2.msra.mxu0 0.0
    %1220 = vmatprep.subr.mxu0 0.0
    %1221 = vmatpush2.msra.mxu0 0.0
    %1222 = vmatprep.subr.mxu0 0.0
    %1223 = vmatpush2.msra.mxu0 0.0
    %1224 = vmatprep.mubr.f32.mxu0 0.0
    %1225 = vmatmul.mubr.f32.gmra.mxu0 %v1087
    %v1226 = vpop.f32.mrf.mxu0
    %v1227 = vadd.f32 0.0, %v1226
    %v1228 = vpop.f32.mrf.mxu0
    %1229 = vdwg.mxu0
    %v1230 = vadd.f32 %v364, %v1227
    %v1231 = vxor.u32 %v1230, 2147483648
    %v1232 = vmul.f32 %v1231, 1.442695
    %v1233 = vpow.pop %v1232
    %v1234 = vadd.f32 %v1233, 1.0
    %v1235 = vrcp.pop %v1234
    %v1236 = vmul.f32 1.0, %v1235
    %v1237 = vtanh.pop %v1230
    %v1238 = vmul.f32 %v1236, %v1073
    %1240 = vrot.lane.b32.xlu0 %v1237, 64
    %v1241 = vpop.permute.xlu0 %1240
    %v1243 = vmul.f32 %v1236, %v1241
    %1245 = vrot.lane.b32.xlu0 %v1243, 32
    %v1246 = vpop.permute.xlu0 %1245
    %v1248 = vadd.f32 %v1238, %v1246
    %v1249 = vtanh.pop %v1248
    %1251 = vrot.lane.b32.xlu0 %v1249, 64
    %v1252 = vpop.permute.xlu0 %1251
    %v1254 = vmul.f32 %v1236, %v1252
    %v1255 = vld [vmem:[%s6 + $0x80] sm:$0xff]
    %v1256 = vld [vmem:[%s6 + $0x88] sm:$0xff]
    %v1257 = vld [vmem:[%s6 + $0x90] sm:$0xff]
    %v1258 = vld [vmem:[%s6 + $0x98] sm:$0xff]
    %1260 = vrot.lane.b32.xlu0 %v1254, 32
    %v1261 = vpop.permute.xlu0 %1260
    %v1262 = vsel %vm452, %v1261, 0
    %1264 = vmatprep.subr.mxu0 0.0
    %1265 = vmatpush1.msra.mxu0 0.0
    %1266 = vmatprep.subr.mxu0 0.0
    %1267 = vmatpush1.msra.mxu0 0.0
    %1268 = vmatprep.subr.mxu0 0.0
    %1269 = vmatpush1.msra.mxu0 0.0
    %1270 = vmatprep.subr.mxu0 0.0
    %1271 = vmatpush1.msra.mxu0 0.0
    %1272 = vmatprep.subr.mxu0 0.0
    %1273 = vmatpush1.msra.mxu0 0.0
    %1274 = vmatprep.subr.mxu0 0.0
    %1275 = vmatpush1.msra.mxu0 0.0
    %1276 = vmatprep.subr.mxu0 0.0
    %1277 = vmatpush1.msra.mxu0 0.0
    %1278 = vmatprep.subr.mxu0 0.0
    %1279 = vmatpush1.msra.mxu0 0.0
    %1280 = vmatprep.subr.mxu0 0.0
    %1281 = vmatpush1.msra.mxu0 0.0
    %1282 = vmatprep.subr.mxu0 0.0
    %1283 = vmatpush1.msra.mxu0 0.0
    %1284 = vmatprep.subr.mxu0 0.0
    %1285 = vmatpush1.msra.mxu0 0.0
    %1286 = vmatprep.subr.mxu0 0.0
    %1287 = vmatpush1.msra.mxu0 0.0
    %1288 = vmatprep.subr.mxu0 0.0
    %1289 = vmatpush1.msra.mxu0 %v1258
    %1290 = vmatprep.subr.mxu0 0.0
    %1291 = vmatpush1.msra.mxu0 %v1257
    %1292 = vmatprep.subr.mxu0 0.0
    %1293 = vmatpush1.msra.mxu0 %v1256
    %1294 = vmatprep.subr.mxu0 0.0
    %1295 = vmatpush1.msra.mxu0 %v1255
    %1296 = vmatprep.subr.mxu0 0.0
    %1297 = vmatpush2.msra.mxu0 0.0
    %1298 = vmatprep.subr.mxu0 0.0
    %1299 = vmatpush2.msra.mxu0 0.0
    %1300 = vmatprep.subr.mxu0 0.0
    %1301 = vmatpush2.msra.mxu0 0.0
    %1302 = vmatprep.subr.mxu0 0.0
    %1303 = vmatpush2.msra.mxu0 0.0
    %1304 = vmatprep.subr.mxu0 0.0
    %1305 = vmatpush2.msra.mxu0 0.0
    %1306 = vmatprep.subr.mxu0 0.0
    %1307 = vmatpush2.msra.mxu0 0.0
    %1308 = vmatprep.subr.mxu0 0.0
    %1309 = vmatpush2.msra.mxu0 0.0
    %1310 = vmatprep.subr.mxu0 0.0
    %1311 = vmatpush2.msra.mxu0 0.0
    %1312 = vmatprep.subr.mxu0 0.0
    %1313 = vmatpush2.msra.mxu0 0.0
    %1314 = vmatprep.subr.mxu0 0.0
    %1315 = vmatpush2.msra.mxu0 0.0
    %1316 = vmatprep.subr.mxu0 0.0
    %1317 = vmatpush2.msra.mxu0 0.0
    %1318 = vmatprep.subr.mxu0 0.0
    %1319 = vmatpush2.msra.mxu0 0.0
    %1320 = vmatprep.subr.mxu0 0.0
    %1321 = vmatpush2.msra.mxu0 0.0
    %1322 = vmatprep.subr.mxu0 0.0
    %1323 = vmatpush2.msra.mxu0 0.0
    %1324 = vmatprep.subr.mxu0 0.0
    %1325 = vmatpush2.msra.mxu0 0.0
    %1326 = vmatprep.subr.mxu0 0.0
    %1327 = vmatpush2.msra.mxu0 0.0
    %1328 = vmatprep.mubr.f32.mxu0 0.0
    %1329 = vmatmul.mubr.f32.gmra.mxu0 %v1262
    %v1330 = vpop.f32.mrf.mxu0
    %v1331 = vadd.f32 0.0, %v1330
    %v1332 = vpop.f32.mrf.mxu0
    %1333 = vdwg.mxu0
    %v1334 = vadd.f32 %v1159, %v1331
    %1335 = vmatprep.subr.mxu0 0.0
    %1336 = vmatpush1.msra.mxu0 0.0
    %1337 = vmatprep.subr.mxu0 0.0
    %1338 = vmatpush1.msra.mxu0 0.0
    %1339 = vmatprep.subr.mxu0 0.0
    %1340 = vmatpush1.msra.mxu0 0.0
    %1341 = vmatprep.subr.mxu0 0.0
    %1342 = vmatpush1.msra.mxu0 0.0
    %1343 = vmatprep.subr.mxu0 0.0
    %1344 = vmatpush1.msra.mxu0 0.0
    %1345 = vmatprep.subr.mxu0 0.0
    %1346 = vmatpush1.msra.mxu0 0.0
    %1347 = vmatprep.subr.mxu0 0.0
    %1348 = vmatpush1.msra.mxu0 0.0
    %1349 = vmatprep.subr.mxu0 0.0
    %1350 = vmatpush1.msra.mxu0 0.0
    %1351 = vmatprep.subr.mxu0 0.0
    %1352 = vmatpush1.msra.mxu0 0.0
    %1353 = vmatprep.subr.mxu0 0.0
    %1354 = vmatpush1.msra.mxu0 0.0
    %1355 = vmatprep.subr.mxu0 0.0
    %1356 = vmatpush1.msra.mxu0 0.0
    %1357 = vmatprep.subr.mxu0 0.0
    %1358 = vmatpush1.msra.mxu0 0.0
    %1359 = vmatprep.subr.mxu0 0.0
    %1360 = vmatpush1.msra.mxu0 %v442
    %1361 = vmatprep.subr.mxu0 0.0
    %1362 = vmatpush1.msra.mxu0 %v441
    %1363 = vmatprep.subr.mxu0 0.0
    %1364 = vmatpush1.msra.mxu0 %v440
    %1365 = vmatprep.subr.mxu0 0.0
    %1366 = vmatpush1.msra.mxu0 %v439
    %1367 = vmatprep.subr.mxu0 0.0
    %1368 = vmatpush2.msra.mxu0 0.0
    %1369 = vmatprep.subr.mxu0 0.0
    %1370 = vmatpush2.msra.mxu0 0.0
    %1371 = vmatprep.subr.mxu0 0.0
    %1372 = vmatpush2.msra.mxu0 0.0
    %1373 = vmatprep.subr.mxu0 0.0
    %1374 = vmatpush2.msra.mxu0 0.0
    %1375 = vmatprep.subr.mxu0 0.0
    %1376 = vmatpush2.msra.mxu0 0.0
    %1377 = vmatprep.subr.mxu0 0.0
    %1378 = vmatpush2.msra.mxu0 0.0
    %1379 = vmatprep.subr.mxu0 0.0
    %1380 = vmatpush2.msra.mxu0 0.0
    %1381 = vmatprep.subr.mxu0 0.0
    %1382 = vmatpush2.msra.mxu0 0.0
    %1383 = vmatprep.subr.mxu0 0.0
    %1384 = vmatpush2.msra.mxu0 0.0
    %1385 = vmatprep.subr.mxu0 0.0
    %1386 = vmatpush2.msra.mxu0 0.0
    %1387 = vmatprep.subr.mxu0 0.0
    %1388 = vmatpush2.msra.mxu0 0.0
    %1389 = vmatprep.subr.mxu0 0.0
    %1390 = vmatpush2.msra.mxu0 0.0
    %1391 = vmatprep.subr.mxu0 0.0
    %1392 = vmatpush2.msra.mxu0 0.0
    %1393 = vmatprep.subr.mxu0 0.0
    %1394 = vmatpush2.msra.mxu0 0.0
    %1395 = vmatprep.subr.mxu0 0.0
    %1396 = vmatpush2.msra.mxu0 0.0
    %1397 = vmatprep.subr.mxu0 0.0
    %1398 = vmatpush2.msra.mxu0 0.0
    %1399 = vmatprep.mubr.f32.mxu0 0.0
    %1400 = vmatmul.mubr.f32.gmra.mxu0 %v1262
    %v1401 = vpop.f32.mrf.mxu0
    %v1402 = vadd.f32 0.0, %v1401
    %v1403 = vpop.f32.mrf.mxu0
    %1404 = vdwg.mxu0
    %v1405 = vadd.f32 %v366, %v1402
    %v1406 = vxor.u32 %v1405, 2147483648
    %v1407 = vmul.f32 %v1406, 1.442695
    %v1408 = vpow.pop %v1407
    %v1409 = vadd.f32 %v1408, 1.0
    %v1410 = vrcp.pop %v1409
    %v1411 = vmul.f32 1.0, %v1410
    %v1412 = vtanh.pop %v1405
    %v1413 = vmul.f32 %v1411, %v1248
    %1415 = vrot.lane.b32.xlu0 %v1412, 64
    %v1416 = vpop.permute.xlu0 %1415
    %v1418 = vmul.f32 %v1411, %v1416
    %1420 = vrot.lane.b32.xlu0 %v1418, 32
    %v1421 = vpop.permute.xlu0 %1420
    %v1423 = vadd.f32 %v1413, %v1421
    %v1424 = vtanh.pop %v1423
    %1426 = vrot.lane.b32.xlu0 %v1424, 64
    %v1427 = vpop.permute.xlu0 %1426
    %v1429 = vmul.f32 %v1411, %v1427
    %v1430 = vld [vmem:[%s6 + $0xa0] sm:$0xff]
    %v1431 = vld [vmem:[%s6 + $0xa8] sm:$0xff]
    %v1432 = vld [vmem:[%s6 + $0xb0] sm:$0xff]
    %v1433 = vld [vmem:[%s6 + $0xb8] sm:$0xff]
    %1435 = vrot.lane.b32.xlu0 %v1429, 32
    %v1436 = vpop.permute.xlu0 %1435
    %v1437 = vsel %vm452, %v1436, 0
    %1439 = vmatprep.subr.mxu0 0.0
    %1440 = vmatpush1.msra.mxu0 0.0
    %1441 = vmatprep.subr.mxu0 0.0
    %1442 = vmatpush1.msra.mxu0 0.0
    %1443 = vmatprep.subr.mxu0 0.0
    %1444 = vmatpush1.msra.mxu0 0.0
    %1445 = vmatprep.subr.mxu0 0.0
    %1446 = vmatpush1.msra.mxu0 0.0
    %1447 = vmatprep.subr.mxu0 0.0
    %1448 = vmatpush1.msra.mxu0 0.0
    %1449 = vmatprep.subr.mxu0 0.0
    %1450 = vmatpush1.msra.mxu0 0.0
    %1451 = vmatprep.subr.mxu0 0.0
    %1452 = vmatpush1.msra.mxu0 0.0
    %1453 = vmatprep.subr.mxu0 0.0
    %1454 = vmatpush1.msra.mxu0 0.0
    %1455 = vmatprep.subr.mxu0 0.0
    %1456 = vmatpush1.msra.mxu0 0.0
    %1457 = vmatprep.subr.mxu0 0.0
    %1458 = vmatpush1.msra.mxu0 0.0
    %1459 = vmatprep.subr.mxu0 0.0
    %1460 = vmatpush1.msra.mxu0 0.0
    %1461 = vmatprep.subr.mxu0 0.0
    %1462 = vmatpush1.msra.mxu0 0.0
    %1463 = vmatprep.subr.mxu0 0.0
    %1464 = vmatpush1.msra.mxu0 %v1433
    %1465 = vmatprep.subr.mxu0 0.0
    %1466 = vmatpush1.msra.mxu0 %v1432
    %1467 = vmatprep.subr.mxu0 0.0
    %1468 = vmatpush1.msra.mxu0 %v1431
    %1469 = vmatprep.subr.mxu0 0.0
    %1470 = vmatpush1.msra.mxu0 %v1430
    %1471 = vmatprep.subr.mxu0 0.0
    %1472 = vmatpush2.msra.mxu0 0.0
    %1473 = vmatprep.subr.mxu0 0.0
    %1474 = vmatpush2.msra.mxu0 0.0
    %1475 = vmatprep.subr.mxu0 0.0
    %1476 = vmatpush2.msra.mxu0 0.0
    %1477 = vmatprep.subr.mxu0 0.0
    %1478 = vmatpush2.msra.mxu0 0.0
    %1479 = vmatprep.subr.mxu0 0.0
    %1480 = vmatpush2.msra.mxu0 0.0
    %1481 = vmatprep.subr.mxu0 0.0
    %1482 = vmatpush2.msra.mxu0 0.0
    %1483 = vmatprep.subr.mxu0 0.0
    %1484 = vmatpush2.msra.mxu0 0.0
    %1485 = vmatprep.subr.mxu0 0.0
    %1486 = vmatpush2.msra.mxu0 0.0
    %1487 = vmatprep.subr.mxu0 0.0
    %1488 = vmatpush2.msra.mxu0 0.0
    %1489 = vmatprep.subr.mxu0 0.0
    %1490 = vmatpush2.msra.mxu0 0.0
    %1491 = vmatprep.subr.mxu0 0.0
    %1492 = vmatpush2.msra.mxu0 0.0
    %1493 = vmatprep.subr.mxu0 0.0
    %1494 = vmatpush2.msra.mxu0 0.0
    %1495 = vmatprep.subr.mxu0 0.0
    %1496 = vmatpush2.msra.mxu0 0.0
    %1497 = vmatprep.subr.mxu0 0.0
    %1498 = vmatpush2.msra.mxu0 0.0
    %1499 = vmatprep.subr.mxu0 0.0
    %1500 = vmatpush2.msra.mxu0 0.0
    %1501 = vmatprep.subr.mxu0 0.0
    %1502 = vmatpush2.msra.mxu0 0.0
    %1503 = vmatprep.mubr.f32.mxu0 0.0
    %1504 = vmatmul.mubr.f32.gmra.mxu0 %v1437
    %v1505 = vpop.f32.mrf.mxu0
    %v1506 = vadd.f32 0.0, %v1505
    %v1507 = vpop.f32.mrf.mxu0
    %1508 = vdwg.mxu0
    %v1509 = vadd.f32 %v1334, %v1506
    %1510 = vmatprep.subr.mxu0 0.0
    %1511 = vmatpush1.msra.mxu0 0.0
    %1512 = vmatprep.subr.mxu0 0.0
    %1513 = vmatpush1.msra.mxu0 0.0
    %1514 = vmatprep.subr.mxu0 0.0
    %1515 = vmatpush1.msra.mxu0 0.0
    %1516 = vmatprep.subr.mxu0 0.0
    %1517 = vmatpush1.msra.mxu0 0.0
    %1518 = vmatprep.subr.mxu0 0.0
    %1519 = vmatpush1.msra.mxu0 0.0
    %1520 = vmatprep.subr.mxu0 0.0
    %1521 = vmatpush1.msra.mxu0 0.0
    %1522 = vmatprep.subr.mxu0 0.0
    %1523 = vmatpush1.msra.mxu0 0.0
    %1524 = vmatprep.subr.mxu0 0.0
    %1525 = vmatpush1.msra.mxu0 0.0
    %1526 = vmatprep.subr.mxu0 0.0
    %1527 = vmatpush1.msra.mxu0 0.0
    %1528 = vmatprep.subr.mxu0 0.0
    %1529 = vmatpush1.msra.mxu0 0.0
    %1530 = vmatprep.subr.mxu0 0.0
    %1531 = vmatpush1.msra.mxu0 0.0
    %1532 = vmatprep.subr.mxu0 0.0
    %1533 = vmatpush1.msra.mxu0 0.0
    %1534 = vmatprep.subr.mxu0 0.0
    %1535 = vmatpush1.msra.mxu0 %v442
    %1536 = vmatprep.subr.mxu0 0.0
    %1537 = vmatpush1.msra.mxu0 %v441
    %1538 = vmatprep.subr.mxu0 0.0
    %1539 = vmatpush1.msra.mxu0 %v440
    %1540 = vmatprep.subr.mxu0 0.0
    %1541 = vmatpush1.msra.mxu0 %v439
    %1542 = vmatprep.subr.mxu0 0.0
    %1543 = vmatpush2.msra.mxu0 0.0
    %1544 = vmatprep.subr.mxu0 0.0
    %1545 = vmatpush2.msra.mxu0 0.0
    %1546 = vmatprep.subr.mxu0 0.0
    %1547 = vmatpush2.msra.mxu0 0.0
    %1548 = vmatprep.subr.mxu0 0.0
    %1549 = vmatpush2.msra.mxu0 0.0
    %1550 = vmatprep.subr.mxu0 0.0
    %1551 = vmatpush2.msra.mxu0 0.0
    %1552 = vmatprep.subr.mxu0 0.0
    %1553 = vmatpush2.msra.mxu0 0.0
    %1554 = vmatprep.subr.mxu0 0.0
    %1555 = vmatpush2.msra.mxu0 0.0
    %1556 = vmatprep.subr.mxu0 0.0
    %1557 = vmatpush2.msra.mxu0 0.0
    %1558 = vmatprep.subr.mxu0 0.0
    %1559 = vmatpush2.msra.mxu0 0.0
    %1560 = vmatprep.subr.mxu0 0.0
    %1561 = vmatpush2.msra.mxu0 0.0
    %1562 = vmatprep.subr.mxu0 0.0
    %1563 = vmatpush2.msra.mxu0 0.0
    %1564 = vmatprep.subr.mxu0 0.0
    %1565 = vmatpush2.msra.mxu0 0.0
    %1566 = vmatprep.subr.mxu0 0.0
    %1567 = vmatpush2.msra.mxu0 0.0
    %1568 = vmatprep.subr.mxu0 0.0
    %1569 = vmatpush2.msra.mxu0 0.0
    %1570 = vmatprep.subr.mxu0 0.0
    %1571 = vmatpush2.msra.mxu0 0.0
    %1572 = vmatprep.subr.mxu0 0.0
    %1573 = vmatpush2.msra.mxu0 0.0
    %1574 = vmatprep.mubr.f32.mxu0 0.0
    %1575 = vmatmul.mubr.f32.gmra.mxu0 %v1437
    %v1576 = vpop.f32.mrf.mxu0
    %v1577 = vadd.f32 0.0, %v1576
    %v1578 = vpop.f32.mrf.mxu0
    %1579 = vdwg.mxu0
    %v1580 = vadd.f32 %v435, %v1577
    %v1581 = vxor.u32 %v1580, 2147483648
    %v1582 = vmul.f32 %v1581, 1.442695
    %v1583 = vpow.pop %v1582
    %v1584 = vadd.f32 %v1583, 1.0
    %v1585 = vrcp.pop %v1584
    %v1586 = vmul.f32 1.0, %v1585
    %v1587 = vtanh.pop %v1580
    %v1588 = vmul.f32 %v1586, %v1423
    %1590 = vrot.lane.b32.xlu0 %v1587, 64
    %v1591 = vpop.permute.xlu0 %1590
    %v1593 = vmul.f32 %v1586, %v1591
    %1595 = vrot.lane.b32.xlu0 %v1593, 32
    %v1596 = vpop.permute.xlu0 %1595
    %v1598 = vadd.f32 %v1588, %v1596
    %v1599 = vtanh.pop %v1598
    %1601 = vrot.lane.b32.xlu0 %v1599, 64
    %v1602 = vpop.permute.xlu0 %1601
    %v1604 = vmul.f32 %v1586, %v1602
    %v1605 = vld [vmem:[%s6 + $0xc0] sm:$0xff]
    %v1606 = vld [vmem:[%s6 + $0xc8] sm:$0xff]
    %v1607 = vld [vmem:[%s6 + $0xd0] sm:$0xff]
    %v1608 = vld [vmem:[%s6 + $0xd8] sm:$0xff]
    %1610 = vrot.lane.b32.xlu0 %v1604, 32
    %v1611 = vpop.permute.xlu0 %1610
    %v1612 = vsel %vm452, %v1611, 0
    %1614 = vmatprep.subr.mxu0 0.0
    %1615 = vmatpush1.msra.mxu0 0.0
    %1616 = vmatprep.subr.mxu0 0.0
    %1617 = vmatpush1.msra.mxu0 0.0
    %1618 = vmatprep.subr.mxu0 0.0
    %1619 = vmatpush1.msra.mxu0 0.0
    %1620 = vmatprep.subr.mxu0 0.0
    %1621 = vmatpush1.msra.mxu0 0.0
    %1622 = vmatprep.subr.mxu0 0.0
    %1623 = vmatpush1.msra.mxu0 0.0
    %1624 = vmatprep.subr.mxu0 0.0
    %1625 = vmatpush1.msra.mxu0 0.0
    %1626 = vmatprep.subr.mxu0 0.0
    %1627 = vmatpush1.msra.mxu0 0.0
    %1628 = vmatprep.subr.mxu0 0.0
    %1629 = vmatpush1.msra.mxu0 0.0
    %1630 = vmatprep.subr.mxu0 0.0
    %1631 = vmatpush1.msra.mxu0 0.0
    %1632 = vmatprep.subr.mxu0 0.0
    %1633 = vmatpush1.msra.mxu0 0.0
    %1634 = vmatprep.subr.mxu0 0.0
    %1635 = vmatpush1.msra.mxu0 0.0
    %1636 = vmatprep.subr.mxu0 0.0
    %1637 = vmatpush1.msra.mxu0 0.0
    %1638 = vmatprep.subr.mxu0 0.0
    %1639 = vmatpush1.msra.mxu0 %v1608
    %1640 = vmatprep.subr.mxu0 0.0
    %1641 = vmatpush1.msra.mxu0 %v1607
    %1642 = vmatprep.subr.mxu0 0.0
    %1643 = vmatpush1.msra.mxu0 %v1606
    %1644 = vmatprep.subr.mxu0 0.0
    %1645 = vmatpush1.msra.mxu0 %v1605
    %1646 = vmatprep.subr.mxu0 0.0
    %1647 = vmatpush2.msra.mxu0 0.0
    %1648 = vmatprep.subr.mxu0 0.0
    %1649 = vmatpush2.msra.mxu0 0.0
    %1650 = vmatprep.subr.mxu0 0.0
    %1651 = vmatpush2.msra.mxu0 0.0
    %1652 = vmatprep.subr.mxu0 0.0
    %1653 = vmatpush2.msra.mxu0 0.0
    %1654 = vmatprep.subr.mxu0 0.0
    %1655 = vmatpush2.msra.mxu0 0.0
    %1656 = vmatprep.subr.mxu0 0.0
    %1657 = vmatpush2.msra.mxu0 0.0
    %1658 = vmatprep.subr.mxu0 0.0
    %1659 = vmatpush2.msra.mxu0 0.0
    %1660 = vmatprep.subr.mxu0 0.0
    %1661 = vmatpush2.msra.mxu0 0.0
    %1662 = vmatprep.subr.mxu0 0.0
    %1663 = vmatpush2.msra.mxu0 0.0
    %1664 = vmatprep.subr.mxu0 0.0
    %1665 = vmatpush2.msra.mxu0 0.0
    %1666 = vmatprep.subr.mxu0 0.0
    %1667 = vmatpush2.msra.mxu0 0.0
    %1668 = vmatprep.subr.mxu0 0.0
    %1669 = vmatpush2.msra.mxu0 0.0
    %1670 = vmatprep.subr.mxu0 0.0
    %1671 = vmatpush2.msra.mxu0 0.0
    %1672 = vmatprep.subr.mxu0 0.0
    %1673 = vmatpush2.msra.mxu0 0.0
    %1674 = vmatprep.subr.mxu0 0.0
    %1675 = vmatpush2.msra.mxu0 0.0
    %1676 = vmatprep.subr.mxu0 0.0
    %1677 = vmatpush2.msra.mxu0 0.0
    %1678 = vmatprep.mubr.f32.mxu0 0.0
    %1679 = vmatmul.mubr.f32.gmra.mxu0 %v1612
    %v1680 = vpop.f32.mrf.mxu0
    %v1681 = vadd.f32 0.0, %v1680
    %v1682 = vpop.f32.mrf.mxu0
    %1683 = vdwg.mxu0
    %v1684 = vadd.f32 %v1509, %v1681
    %1685 = vmatprep.subr.mxu0 0.0
    %1686 = vmatpush1.msra.mxu0 0.0
    %1687 = vmatprep.subr.mxu0 0.0
    %1688 = vmatpush1.msra.mxu0 0.0
    %1689 = vmatprep.subr.mxu0 0.0
    %1690 = vmatpush1.msra.mxu0 0.0
    %1691 = vmatprep.subr.mxu0 0.0
    %1692 = vmatpush1.msra.mxu0 0.0
    %1693 = vmatprep.subr.mxu0 0.0
    %1694 = vmatpush1.msra.mxu0 0.0
    %1695 = vmatprep.subr.mxu0 0.0
    %1696 = vmatpush1.msra.mxu0 0.0
    %1697 = vmatprep.subr.mxu0 0.0
    %1698 = vmatpush1.msra.mxu0 0.0
    %1699 = vmatprep.subr.mxu0 0.0
    %1700 = vmatpush1.msra.mxu0 0.0
    %1701 = vmatprep.subr.mxu0 0.0
    %1702 = vmatpush1.msra.mxu0 0.0
    %1703 = vmatprep.subr.mxu0 0.0
    %1704 = vmatpush1.msra.mxu0 0.0
    %1705 = vmatprep.subr.mxu0 0.0
    %1706 = vmatpush1.msra.mxu0 0.0
    %1707 = vmatprep.subr.mxu0 0.0
    %1708 = vmatpush1.msra.mxu0 0.0
    %1709 = vmatprep.subr.mxu0 0.0
    %1710 = vmatpush1.msra.mxu0 %v442
    %1711 = vmatprep.subr.mxu0 0.0
    %1712 = vmatpush1.msra.mxu0 %v441
    %1713 = vmatprep.subr.mxu0 0.0
    %1714 = vmatpush1.msra.mxu0 %v440
    %1715 = vmatprep.subr.mxu0 0.0
    %1716 = vmatpush1.msra.mxu0 %v439
    %1717 = vmatprep.subr.mxu0 0.0
    %1718 = vmatpush2.msra.mxu0 0.0
    %1719 = vmatprep.subr.mxu0 0.0
    %1720 = vmatpush2.msra.mxu0 0.0
    %1721 = vmatprep.subr.mxu0 0.0
    %1722 = vmatpush2.msra.mxu0 0.0
    %1723 = vmatprep.subr.mxu0 0.0
    %1724 = vmatpush2.msra.mxu0 0.0
    %1725 = vmatprep.subr.mxu0 0.0
    %1726 = vmatpush2.msra.mxu0 0.0
    %1727 = vmatprep.subr.mxu0 0.0
    %1728 = vmatpush2.msra.mxu0 0.0
    %1729 = vmatprep.subr.mxu0 0.0
    %1730 = vmatpush2.msra.mxu0 0.0
    %1731 = vmatprep.subr.mxu0 0.0
    %1732 = vmatpush2.msra.mxu0 0.0
    %1733 = vmatprep.subr.mxu0 0.0
    %1734 = vmatpush2.msra.mxu0 0.0
    %1735 = vmatprep.subr.mxu0 0.0
    %1736 = vmatpush2.msra.mxu0 0.0
    %1737 = vmatprep.subr.mxu0 0.0
    %1738 = vmatpush2.msra.mxu0 0.0
    %1739 = vmatprep.subr.mxu0 0.0
    %1740 = vmatpush2.msra.mxu0 0.0
    %1741 = vmatprep.subr.mxu0 0.0
    %1742 = vmatpush2.msra.mxu0 0.0
    %1743 = vmatprep.subr.mxu0 0.0
    %1744 = vmatpush2.msra.mxu0 0.0
    %1745 = vmatprep.subr.mxu0 0.0
    %1746 = vmatpush2.msra.mxu0 0.0
    %1747 = vmatprep.subr.mxu0 0.0
    %1748 = vmatpush2.msra.mxu0 0.0
    %1749 = vmatprep.mubr.f32.mxu0 0.0
    %1750 = vmatmul.mubr.f32.gmra.mxu0 %v1612
    %v1751 = vpop.f32.mrf.mxu0
    %v1752 = vadd.f32 0.0, %v1751
    %v1753 = vpop.f32.mrf.mxu0
    %1754 = vdwg.mxu0
    %v1755 = vadd.f32 %v437, %v1752
    %v1756 = vxor.u32 %v1755, 2147483648
    %v1757 = vmul.f32 %v1756, 1.442695
    %v1758 = vpow.pop %v1757
    %v1759 = vadd.f32 %v1758, 1.0
    %v1760 = vrcp.pop %v1759
    %v1761 = vmul.f32 1.0, %v1760
    %v1762 = vtanh.pop %v1755
    %v1763 = vmul.f32 %v1761, %v1598
    %1765 = vrot.lane.b32.xlu0 %v1762, 64
    %v1766 = vpop.permute.xlu0 %1765
    %v1768 = vmul.f32 %v1761, %v1766
    %1770 = vrot.lane.b32.xlu0 %v1768, 32
    %v1771 = vpop.permute.xlu0 %1770
    %v1773 = vadd.f32 %v1763, %v1771
    %v1774 = vtanh.pop %v1773
    %1776 = vrot.lane.b32.xlu0 %v1774, 64
    %v1777 = vpop.permute.xlu0 %1776
    %v1779 = vmul.f32 %v1761, %v1777
    %v1780 = vld [vmem:[%s6 + $0xe0] sm:$0xff]
    %v1781 = vld [vmem:[%s6 + $0xe8] sm:$0xff]
    %v1782 = vld [vmem:[%s6 + $0xf0] sm:$0xff]
    %v1783 = vld [vmem:[%s6 + $0xf8] sm:$0xff]
    %1785 = vrot.lane.b32.xlu0 %v1779, 32
    %v1786 = vpop.permute.xlu0 %1785
    %v1787 = vsel %vm452, %v1786, 0
    %1789 = vmatprep.subr.mxu0 0.0
    %1790 = vmatpush1.msra.mxu0 0.0
    %1791 = vmatprep.subr.mxu0 0.0
    %1792 = vmatpush1.msra.mxu0 0.0
    %1793 = vmatprep.subr.mxu0 0.0
    %1794 = vmatpush1.msra.mxu0 0.0
    %1795 = vmatprep.subr.mxu0 0.0
    %1796 = vmatpush1.msra.mxu0 0.0
    %1797 = vmatprep.subr.mxu0 0.0
    %1798 = vmatpush1.msra.mxu0 0.0
    %1799 = vmatprep.subr.mxu0 0.0
    %1800 = vmatpush1.msra.mxu0 0.0
    %1801 = vmatprep.subr.mxu0 0.0
    %1802 = vmatpush1.msra.mxu0 0.0
    %1803 = vmatprep.subr.mxu0 0.0
    %1804 = vmatpush1.msra.mxu0 0.0
    %1805 = vmatprep.subr.mxu0 0.0
    %1806 = vmatpush1.msra.mxu0 0.0
    %1807 = vmatprep.subr.mxu0 0.0
    %1808 = vmatpush1.msra.mxu0 0.0
    %1809 = vmatprep.subr.mxu0 0.0
    %1810 = vmatpush1.msra.mxu0 0.0
    %1811 = vmatprep.subr.mxu0 0.0
    %1812 = vmatpush1.msra.mxu0 0.0
    %1813 = vmatprep.subr.mxu0 0.0
    %1814 = vmatpush1.msra.mxu0 %v1783
    %1815 = vmatprep.subr.mxu0 0.0
    %1816 = vmatpush1.msra.mxu0 %v1782
    %1817 = vmatprep.subr.mxu0 0.0
    %1818 = vmatpush1.msra.mxu0 %v1781
    %1819 = vmatprep.subr.mxu0 0.0
    %1820 = vmatpush1.msra.mxu0 %v1780
    %1821 = vmatprep.subr.mxu0 0.0
    %1822 = vmatpush2.msra.mxu0 0.0
    %1823 = vmatprep.subr.mxu0 0.0
    %1824 = vmatpush2.msra.mxu0 0.0
    %1825 = vmatprep.subr.mxu0 0.0
    %1826 = vmatpush2.msra.mxu0 0.0
    %1827 = vmatprep.subr.mxu0 0.0
    %1828 = vmatpush2.msra.mxu0 0.0
    %1829 = vmatprep.subr.mxu0 0.0
    %1830 = vmatpush2.msra.mxu0 0.0
    %1831 = vmatprep.subr.mxu0 0.0
    %1832 = vmatpush2.msra.mxu0 0.0
    %1833 = vmatprep.subr.mxu0 0.0
    %1834 = vmatpush2.msra.mxu0 0.0
    %1835 = vmatprep.subr.mxu0 0.0
    %1836 = vmatpush2.msra.mxu0 0.0
    %1837 = vmatprep.subr.mxu0 0.0
    %1838 = vmatpush2.msra.mxu0 0.0
    %1839 = vmatprep.subr.mxu0 0.0
    %1840 = vmatpush2.msra.mxu0 0.0
    %1841 = vmatprep.subr.mxu0 0.0
    %1842 = vmatpush2.msra.mxu0 0.0
    %1843 = vmatprep.subr.mxu0 0.0
    %1844 = vmatpush2.msra.mxu0 0.0
    %1845 = vmatprep.subr.mxu0 0.0
    %1846 = vmatpush2.msra.mxu0 0.0
    %1847 = vmatprep.subr.mxu0 0.0
    %1848 = vmatpush2.msra.mxu0 0.0
    %1849 = vmatprep.subr.mxu0 0.0
    %1850 = vmatpush2.msra.mxu0 0.0
    %1851 = vmatprep.subr.mxu0 0.0
    %1852 = vmatpush2.msra.mxu0 0.0
    %1853 = vmatprep.mubr.f32.mxu0 0.0
    %1854 = vmatmul.mubr.f32.gmra.mxu0 %v1787
    %v1855 = vpop.f32.mrf.mxu0
    %v1856 = vadd.f32 0.0, %v1855
    %v1857 = vpop.f32.mrf.mxu0
    %1858 = vdwg.mxu0
    %v1859 = vadd.f32 %v1684, %v1856
    %v1860 = vld [vmem:[%s8] sm:$0x1]
    %v1861 = vld [vmem:[%s9] sm:$0x1]
    %v1862 = vsel %vm452, %v1859, 0.0
    %v1863 = vrot.slane %v1862, 4
    %v1864 = vadd.f32 %v1862, %v1863
    %v1865 = vrot.slane %v1864, 2
    %v1866 = vadd.f32 %v1864, %v1865
    %v1867 = vrot.slane %v1866, 1
    %v1868 = vadd.f32 %v1866, %v1867
    %v1869 = vrcp.pop 8.0
    %v1870 = vmul.f32 %v1868, %v1869
    %v1871 = vsub.f32 %v1859, %v1870
    %v1872 = vmul.f32 %v1871, %v1871
    %v1873 = vsel %vm452, %v1872, 0.0
    %v1874 = vrot.slane %v1873, 4
    %v1875 = vadd.f32 %v1873, %v1874
    %v1876 = vrot.slane %v1875, 2
    %v1877 = vadd.f32 %v1875, %v1876
    %v1878 = vrot.slane %v1877, 1
    %v1879 = vadd.f32 %v1877, %v1878
    %v1880 = vmul.f32 %v1879, %v1869
    %v1881 = vadd.f32 %v1880, 1e-05
    %v1882 = vrsqrt.pop %v1881
    %v1883 = vmul.f32 %v1860, %v1882
    %v1885 = vlaneseq
    %v1886 = vshrl.u32 %v1885, 7
    %v1887 = vsub.s32 0, %v1886
    %v1888 = vrot.slane %v1883, %v1887
    %v1890 = vmul.f32 %v1859, %v1888
    %v1891 = vmul.f32 %v1870, %v1883
    %v1892 = vsub.f32 %v1861, %v1891
    %v1894 = vlaneseq
    %v1895 = vshrl.u32 %v1894, 7
    %v1896 = vsub.s32 0, %v1895
    %v1897 = vrot.slane %v1892, %v1896
    %v1899 = vadd.f32 %v1890, %v1897
    %v1900 = vmax.f32 %v1899, 0.0
    %v1901 = vld [vmem:[%s10] sm:$0xff]
    %v1902 = vld [vmem:[%s10 + $0x8] sm:$0xff]
    %v1903 = vld [vmem:[%s10 + $0x10] sm:$0xff]
    %v1904 = vld [vmem:[%s10 + $0x18] sm:$0xff]
    %v1905 = vld [vmem:[%s11] sm:$0x1]
    %v1907 = vlaneseq
    %v1908 = vshrl.u32 %v1907, 7
    %v1909 = vsub.s32 0, %v1908
    %v1910 = vrot.slane %v1905, %v1909
    %v1913 = vsel %vm452, %v1900, 0
    %1915 = vmatprep.subr.mxu0 0.0
    %1916 = vmatpush1.msra.mxu0 0.0
    %1917 = vmatprep.subr.mxu0 0.0
    %1918 = vmatpush1.msra.mxu0 0.0
    %1919 = vmatprep.subr.mxu0 0.0
    %1920 = vmatpush1.msra.mxu0 0.0
    %1921 = vmatprep.subr.mxu0 0.0
    %1922 = vmatpush1.msra.mxu0 0.0
    %1923 = vmatprep.subr.mxu0 0.0
    %1924 = vmatpush1.msra.mxu0 0.0
    %1925 = vmatprep.subr.mxu0 0.0
    %1926 = vmatpush1.msra.mxu0 0.0
    %1927 = vmatprep.subr.mxu0 0.0
    %1928 = vmatpush1.msra.mxu0 0.0
    %1929 = vmatprep.subr.mxu0 0.0
    %1930 = vmatpush1.msra.mxu0 0.0
    %1931 = vmatprep.subr.mxu0 0.0
    %1932 = vmatpush1.msra.mxu0 0.0
    %1933 = vmatprep.subr.mxu0 0.0
    %1934 = vmatpush1.msra.mxu0 0.0
    %1935 = vmatprep.subr.mxu0 0.0
    %1936 = vmatpush1.msra.mxu0 0.0
    %1937 = vmatprep.subr.mxu0 0.0
    %1938 = vmatpush1.msra.mxu0 0.0
    %1939 = vmatprep.subr.mxu0 0.0
    %1940 = vmatpush1.msra.mxu0 %v1904
    %1941 = vmatprep.subr.mxu0 0.0
    %1942 = vmatpush1.msra.mxu0 %v1903
    %1943 = vmatprep.subr.mxu0 0.0
    %1944 = vmatpush1.msra.mxu0 %v1902
    %1945 = vmatprep.subr.mxu0 0.0
    %1946 = vmatpush1.msra.mxu0 %v1901
    %1947 = vmatprep.subr.mxu0 0.0
    %1948 = vmatpush2.msra.mxu0 0.0
    %1949 = vmatprep.subr.mxu0 0.0
    %1950 = vmatpush2.msra.mxu0 0.0
    %1951 = vmatprep.subr.mxu0 0.0
    %1952 = vmatpush2.msra.mxu0 0.0
    %1953 = vmatprep.subr.mxu0 0.0
    %1954 = vmatpush2.msra.mxu0 0.0
    %1955 = vmatprep.subr.mxu0 0.0
    %1956 = vmatpush2.msra.mxu0 0.0
    %1957 = vmatprep.subr.mxu0 0.0
    %1958 = vmatpush2.msra.mxu0 0.0
    %1959 = vmatprep.subr.mxu0 0.0
    %1960 = vmatpush2.msra.mxu0 0.0
    %1961 = vmatprep.subr.mxu0 0.0
    %1962 = vmatpush2.msra.mxu0 0.0
    %1963 = vmatprep.subr.mxu0 0.0
    %1964 = vmatpush2.msra.mxu0 0.0
    %1965 = vmatprep.subr.mxu0 0.0
    %1966 = vmatpush2.msra.mxu0 0.0
    %1967 = vmatprep.subr.mxu0 0.0
    %1968 = vmatpush2.msra.mxu0 0.0
    %1969 = vmatprep.subr.mxu0 0.0
    %1970 = vmatpush2.msra.mxu0 0.0
    %1971 = vmatprep.subr.mxu0 0.0
    %1972 = vmatpush2.msra.mxu0 0.0
    %1973 = vmatprep.subr.mxu0 0.0
    %1974 = vmatpush2.msra.mxu0 0.0
    %1975 = vmatprep.subr.mxu0 0.0
    %1976 = vmatpush2.msra.mxu0 0.0
    %1977 = vmatprep.subr.mxu0 0.0
    %1978 = vmatpush2.msra.mxu0 0.0
    %1979 = vmatprep.mubr.f32.mxu0 0.0
    %1980 = vmatmul.mubr.f32.gmra.mxu0 %v1913
    %v1981 = vpop.f32.mrf.mxu0
    %v1982 = vadd.f32 %v1910, %v1981
    %v1983 = vpop.f32.mrf.mxu0
    %1984 = vdwg.mxu0
    %v1985 = vld [vmem:[%s12] sm:$0x1]
    %v1986 = vld [vmem:[%s13] sm:$0x1]
    %v1987 = vsel %vm452, %v1982, 0.0
    %v1988 = vrot.slane %v1987, 4
    %v1989 = vadd.f32 %v1987, %v1988
    %v1990 = vrot.slane %v1989, 2
    %v1991 = vadd.f32 %v1989, %v1990
    %v1992 = vrot.slane %v1991, 1
    %v1993 = vadd.f32 %v1991, %v1992
    %v1994 = vmul.f32 %v1993, %v1869
    %v1995 = vsub.f32 %v1982, %v1994
    %v1996 = vmul.f32 %v1995, %v1995
    %v1997 = vsel %vm452, %v1996, 0.0
    %v1998 = vrot.slane %v1997, 4
    %v1999 = vadd.f32 %v1997, %v1998
    %v2000 = vrot.slane %v1999, 2
    %v2001 = vadd.f32 %v1999, %v2000
    %v2002 = vrot.slane %v2001, 1
    %v2003 = vadd.f32 %v2001, %v2002
    %v2004 = vmul.f32 %v2003, %v1869
    %v2005 = vadd.f32 %v2004, 1e-05
    %v2006 = vrsqrt.pop %v2005
    %v2007 = vmul.f32 %v1985, %v2006
    %v2009 = vlaneseq
    %v2010 = vshrl.u32 %v2009, 7
    %v2011 = vsub.s32 0, %v2010
    %v2012 = vrot.slane %v2007, %v2011
    %v2014 = vmul.f32 %v1982, %v2012
    %v2015 = vmul.f32 %v1994, %v2007
    %v2016 = vsub.f32 %v1986, %v2015
    %v2018 = vlaneseq
    %v2019 = vshrl.u32 %v2018, 7
    %v2020 = vsub.s32 0, %v2019
    %v2021 = vrot.slane %v2016, %v2020
    %v2023 = vadd.f32 %v2014, %v2021
    %v2024 = vtanh.pop %v2023
    %v2025 = vld [vmem:[%s14] sm:$0xff]
    %v2026 = vld [vmem:[%s14 + $0x8] sm:$0xff]
    %v2027 = vld [vmem:[%s14 + $0x10] sm:$0xff]
    %v2028 = vld [vmem:[%s14 + $0x18] sm:$0xff]
    %v2029 = vld [vmem:[%s15] sm:$0x1]
    %v2031 = vlaneseq
    %v2032 = vshrl.u32 %v2031, 7
    %v2033 = vsub.s32 0, %v2032
    %v2034 = vrot.slane %v2029, %v2033
    %v2037 = vsel %vm452, %v2024, 0
    %2039 = vmatprep.subr.mxu0 0.0
    %2040 = vmatpush1.msra.mxu0 0.0
    %2041 = vmatprep.subr.mxu0 0.0
    %2042 = vmatpush1.msra.mxu0 0.0
    %2043 = vmatprep.subr.mxu0 0.0
    %2044 = vmatpush1.msra.mxu0 0.0
    %2045 = vmatprep.subr.mxu0 0.0
    %2046 = vmatpush1.msra.mxu0 0.0
    %2047 = vmatprep.subr.mxu0 0.0
    %2048 = vmatpush1.msra.mxu0 0.0
    %2049 = vmatprep.subr.mxu0 0.0
    %2050 = vmatpush1.msra.mxu0 0.0
    %2051 = vmatprep.subr.mxu0 0.0
    %2052 = vmatpush1.msra.mxu0 0.0
    %2053 = vmatprep.subr.mxu0 0.0
    %2054 = vmatpush1.msra.mxu0 0.0
    %2055 = vmatprep.subr.mxu0 0.0
    %2056 = vmatpush1.msra.mxu0 0.0
    %2057 = vmatprep.subr.mxu0 0.0
    %2058 = vmatpush1.msra.mxu0 0.0
    %2059 = vmatprep.subr.mxu0 0.0
    %2060 = vmatpush1.msra.mxu0 0.0
    %2061 = vmatprep.subr.mxu0 0.0
    %2062 = vmatpush1.msra.mxu0 0.0
    %2063 = vmatprep.subr.mxu0 0.0
    %2064 = vmatpush1.msra.mxu0 %v2028
    %2065 = vmatprep.subr.mxu0 0.0
    %2066 = vmatpush1.msra.mxu0 %v2027
    %2067 = vmatprep.subr.mxu0 0.0
    %2068 = vmatpush1.msra.mxu0 %v2026
    %2069 = vmatprep.subr.mxu0 0.0
    %2070 = vmatpush1.msra.mxu0 %v2025
    %2071 = vmatprep.subr.mxu0 0.0
    %2072 = vmatpush2.msra.mxu0 0.0
    %2073 = vmatprep.subr.mxu0 0.0
    %2074 = vmatpush2.msra.mxu0 0.0
    %2075 = vmatprep.subr.mxu0 0.0
    %2076 = vmatpush2.msra.mxu0 0.0
    %2077 = vmatprep.subr.mxu0 0.0
    %2078 = vmatpush2.msra.mxu0 0.0
    %2079 = vmatprep.subr.mxu0 0.0
    %2080 = vmatpush2.msra.mxu0 0.0
    %2081 = vmatprep.subr.mxu0 0.0
    %2082 = vmatpush2.msra.mxu0 0.0
    %2083 = vmatprep.subr.mxu0 0.0
    %2084 = vmatpush2.msra.mxu0 0.0
    %2085 = vmatprep.subr.mxu0 0.0
    %2086 = vmatpush2.msra.mxu0 0.0
    %2087 = vmatprep.subr.mxu0 0.0
    %2088 = vmatpush2.msra.mxu0 0.0
    %2089 = vmatprep.subr.mxu0 0.0
    %2090 = vmatpush2.msra.mxu0 0.0
    %2091 = vmatprep.subr.mxu0 0.0
    %2092 = vmatpush2.msra.mxu0 0.0
    %2093 = vmatprep.subr.mxu0 0.0
    %2094 = vmatpush2.msra.mxu0 0.0
    %2095 = vmatprep.subr.mxu0 0.0
    %2096 = vmatpush2.msra.mxu0 0.0
    %2097 = vmatprep.subr.mxu0 0.0
    %2098 = vmatpush2.msra.mxu0 0.0
    %2099 = vmatprep.subr.mxu0 0.0
    %2100 = vmatpush2.msra.mxu0 0.0
    %2101 = vmatprep.subr.mxu0 0.0
    %2102 = vmatpush2.msra.mxu0 0.0
    %2103 = vmatprep.mubr.f32.mxu0 0.0
    %2104 = vmatmul.mubr.f32.gmra.mxu0 %v2037
    %v2105 = vpop.f32.mrf.mxu0
    %v2106 = vadd.f32 %v2034, %v2105
    %v2107 = vpop.f32.mrf.mxu0
    %2108 = vdwg.mxu0
    %v2109 = vld [vmem:[%s16] sm:$0x1]
    %v2110 = vld [vmem:[%s17] sm:$0x1]
    %vm2111 = vcmask 97280
    %v2112 = vsel %vm2111, %v2106, 0.0
    %v2113 = vrot.slane %v2112, 4
    %v2114 = vadd.f32 %v2112, %v2113
    %v2115 = vrot.slane %v2114, 2
    %v2116 = vadd.f32 %v2114, %v2115
    %v2117 = vrot.slane %v2116, 1
    %v2118 = vadd.f32 %v2116, %v2117
    %v2119 = vmul.f32 %v2118, %v1869
    %v2120 = vsub.f32 %v2106, %v2119
    %v2121 = vmul.f32 %v2120, %v2120
    %v2122 = vsel %vm2111, %v2121, 0.0
    %v2123 = vrot.slane %v2122, 4
    %v2124 = vadd.f32 %v2122, %v2123
    %v2125 = vrot.slane %v2124, 2
    %v2126 = vadd.f32 %v2124, %v2125
    %v2127 = vrot.slane %v2126, 1
    %v2128 = vadd.f32 %v2126, %v2127
    %v2129 = vmul.f32 %v2128, %v1869
    %v2130 = vadd.f32 %v2129, 1e-05
    %v2131 = vrsqrt.pop %v2130
    %v2132 = vmul.f32 %v2109, %v2131
    %v2134 = vlaneseq
    %v2135 = vshrl.u32 %v2134, 7
    %v2136 = vsub.s32 0, %v2135
    %v2137 = vrot.slane %v2132, %v2136
    %v2139 = vmul.f32 %v2106, %v2137
    %v2140 = vmul.f32 %v2119, %v2132
    %v2141 = vsub.f32 %v2110, %v2140
    %v2143 = vlaneseq
    %v2144 = vshrl.u32 %v2143, 7
    %v2145 = vsub.s32 0, %v2144
    %v2146 = vrot.slane %v2141, %v2145
    %v2148 = vadd.f32 %v2139, %v2146
    %v2149 = vsel %vm2111, %v2148, -inf
    %2150 = vmax.xlane.f32.xlu0 %v2149
    %v2151 = vpop.xlane.xlu0 %2150
    %v2152 = vsub.f32 %v2148, %v2151
    %v2153 = vmul.f32 %v2152, 1.442695
    %v2154 = vpow.pop %v2153
    %v2155 = vsel %vm2111, %v2154, 0.0
    %2156 = vadd.xlane.f32.xlu0 %v2155
    %v2157 = vpop.xlane.xlu0 %2156
    %v2158 = vrcp.pop %v2157
    %v2159 = vmul.f32 %v2154, %v2158
    %2160 = vst.msk [vmem:[#allocation2] sm:$0xff] %vm2111, %v2159
    // Predicated region
    $region74: #{model_hapt_forward.1} parent=1 // pred_check
      _
    $region75: #{model_hapt_forward.1} parent=1 // pred_check_branch
      %2162 = sbr.rel (0) target = $region77
    $region76: #{model_hapt_forward.1} parent=1 // pred_region
      %s2164 = ssub.s32 128, 128
      %2165 = vsyncadd [#allocation3], %s2164
      %s2167 = sshll.u32 [#allocation2], 4
      %s2168 = int_to_ptr.vmem [resolvable:$true] %s2167
      %2170 = dma.vmem_to_hbm [thread:$0]  %s2168, 128, %s18, [#allocation3]
    $region77: #{model_hapt_forward.1} parent=1 // pred_fallthru
      _
    // Predicated region
    $region78: #{model_hapt_forward.1} parent=1 // pred_check
      _
    $region79: #{model_hapt_forward.1} parent=1 // pred_check_branch
      %2172 = sbr.rel (0) target = $region81
    $region80: #{model_hapt_forward.1} parent=1 // pred_region
      %2173 = dma.done [#allocation3], 128
    $region81: #{model_hapt_forward.1} parent=1 // pred_fallthru
      _
    %2174 = vsyncpa [#allocation3], 1

</llo_original>
